<compile_context>
chip_gen: v5e
topology: v5e:2x2
jax: 0.10.0
libtpu: 0.0.40
codegen_flags: <defaults>
</compile_context>

<pallas_src>
import math

import jax
import jax.numpy as jnp
from jax import lax
from jax.experimental import pallas as pl
from jax.experimental.pallas import tpu as pltpu


def bilstm_kernel(x_ref, wih_ref, whh_ref, ball_ref, wemb_ref, bemb_ref,
                  out_ref,
                  gxf_scr, gxb_scr, *rec_scr):
    T = x_ref.shape[0]
    B = x_ref.shape[1]
    nIn = x_ref.shape[2]
    H2 = whh_ref.shape[0]            # (2H, 8H) block-diagonal recurrent weight
    H = H2 // 2
    H4 = 4 * H
    cdt = x_ref.dtype                # compute (matmul-operand) dtype
    combined_rec = (len(rec_scr) == 1)

    # ---- 1) Hoisted input projection for BOTH directions: one MXU matmul. --
    x2 = x_ref[...].reshape(T * B, nIn)
    gx = (jnp.dot(x2, wih_ref[...], preferred_element_type=jnp.float32)
          + ball_ref[...])                                   # (T*B, 8H) f32
    gxf_scr[...] = gx[:, :H4].reshape(T, B, H4).astype(cdt)
    gxb_scr[...] = gx[:, H4:].reshape(T, B, H4).astype(cdt)

    whh_bd = whh_ref[...]                                    # (2H, 8H)

    def lstm_cell(pre, c_prev):
        # PyTorch gate order [i, f, g, o].  At H=32 these are sub-vreg lane
        # slices; for H >= 128 they are whole vregs and need no extra work.
        i_g = jax.nn.sigmoid(pre[:, 0 * H:1 * H])
        f_g = jax.nn.sigmoid(pre[:, 1 * H:2 * H])
        g_g = jnp.tanh(pre[:, 2 * H:3 * H])
        o_g = jax.nn.sigmoid(pre[:, 3 * H:4 * H])
        c_new = f_g * c_prev + i_g * g_g
        h_new = o_g * jnp.tanh(c_new)
        return h_new, c_new

    # ---- 2) Fused fwd/bwd recurrence, ONE block-diagonal matmul per step. --
    def step(i, carry):
        h_f, c_f, h_b, c_b = carry
        tf = i
        tb = T - 1 - i

        h_cat = jnp.concatenate([h_f, h_b], axis=1).astype(cdt)     # (B, 2H)
        pre = jnp.dot(h_cat, whh_bd,
                      preferred_element_type=jnp.float32)           # (B, 8H)
        pre_f = pre[:, :H4] + gxf_scr[tf]
        pre_b = pre[:, H4:] + gxb_scr[tb]

        h_f, c_f = lstm_cell(pre_f, c_f)
        h_b, c_b = lstm_cell(pre_b, c_b)

        if combined_rec:
            rec = rec_scr[0]
            rec[tf, :, :H] = h_f.astype(rec.dtype)
            rec[tb, :, H:] = h_b.astype(rec.dtype)
        else:
            rec_scr[0][tf] = h_f.astype(rec_scr[0].dtype)   # full-row stores
            rec_scr[1][tb] = h_b.astype(rec_scr[1].dtype)
        return (h_f, c_f, h_b, c_b)

    z = jnp.zeros((B, H), jnp.float32)
    unroll = T if T <= 16 else 2      # full unroll only for small static T
    lax.fori_loop(0, T, step, (z, z, z, z), unroll=unroll)

    # ---- 3) Embedding epilogue: Linear(2H -> nOut_pad) over all T*B rows. --
    wemb = wemb_ref[...]                                     # (2H, nOut_pad)
    if combined_rec:
        rec = rec_scr[0][...].reshape(T * B, 2 * H)
        out = (jnp.dot(rec, wemb, preferred_element_type=jnp.float32)
               + bemb_ref[...])
    else:
        rf = rec_scr[0][...].reshape(T * B, H)
        rb = rec_scr[1][...].reshape(T * B, H)
        out = (jnp.dot(rf, wemb[:H, :], preferred_element_type=jnp.float32)
               + jnp.dot(rb, wemb[H:, :], preferred_element_type=jnp.float32)
               + bemb_ref[...])
    out_ref[...] = out.reshape(T, B, out_ref.shape[2]).astype(out_ref.dtype)


def bidirectional_lstm(x, params, *, b_block=None, compute_dtype=jnp.float32):
    """x: (T, B, nIn) float32.  Returns (T, B, nOut) float32."""
    T, B, nIn = x.shape
    H = params["whh_f_t"].shape[0]
    nOut = params["wemb_t"].shape[1]
    nOut_pad = ((nOut + 127) // 128) * 128        # lane-dense output stores

    if b_block is None:
        # >= 2 batch tiles (each a multiple of 8 sublanes) so the "parallel"
        # grid axis can shard across v7x's two TensorCores when B allows.
        b_block = B // 2 if (B % 16 == 0) else B
    assert B % b_block == 0, "b_block must divide B"
    grid = (B // b_block,)

    cdt = jnp.dtype(compute_dtype)
    x_c = x.astype(cdt)
    wih_all = params["wih_all"].astype(cdt)       # (nIn, 8H)
    whh_bd = params["whh_bd"].astype(cdt)         # (2H, 8H) block-diagonal
    b_all = params["b_all"]                       # (1, 8H) f32
    wemb = params["wemb_t"].astype(cdt)           # (2H, nOut)
    bemb = params["bemb"]                         # (1, nOut) f32
    wemb_p = jnp.pad(wemb, ((0, 0), (0, nOut_pad - nOut)))
    bemb_p = jnp.pad(bemb, ((0, 0), (0, nOut_pad - nOut)))

    combined_rec = (H % 128 == 0)
    if combined_rec:
        rec_scratch = [pltpu.VMEM((T, b_block, 2 * H), cdt)]
    else:
        rec_scratch = [pltpu.VMEM((T, b_block, H), cdt),
                       pltpu.VMEM((T, b_block, H), cdt)]

    def const_spec(a):
        n = a.ndim
        return pl.BlockSpec(a.shape, lambda b: (0,) * n)

    in_specs = [
        pl.BlockSpec((T, b_block, nIn), lambda b: (0, b, 0)),   # x, batch-tiled
        const_spec(wih_all),
        const_spec(whh_bd),
        const_spec(b_all),
        const_spec(wemb_p),
        const_spec(bemb_p),
    ]
    out_specs = pl.BlockSpec((T, b_block, nOut_pad), lambda b: (0, b, 0))

    # VMEM budget (double-buffered blocks/weights + scratch), with headroom,
    # clamped to [32 MiB, 64 MiB] so it is valid on v5e/v6e and v7x alike.
    csz = cdt.itemsize
    est = (2 * T * b_block * nIn * csz
           + 2 * T * b_block * nOut_pad * 4
           + 2 * (wih_all.size + whh_bd.size + wemb_p.size) * csz
           + 2 * (b_all.size + bemb_p.size) * 4
           + 2 * T * b_block * 4 * H * csz            # gxf + gxb scratch
           + T * b_block * 2 * H * csz)               # rec scratch
    vmem_limit = int(min(max(2 * est, 32 * 2**20), 64 * 2**20))

    out = pl.pallas_call(
        bilstm_kernel,
        out_shape=jax.ShapeDtypeStruct((T, B, nOut_pad), jnp.float32),
        grid=grid,
        in_specs=in_specs,
        out_specs=out_specs,
        scratch_shapes=[pltpu.VMEM((T, b_block, 4 * H), cdt),   # Gx fwd
                        pltpu.VMEM((T, b_block, 4 * H), cdt),   # Gx bwd
                        ] + rec_scratch,
        compiler_params=pltpu.CompilerParams(
            dimension_semantics=("parallel",),
            vmem_limit_bytes=vmem_limit),
    )(x_c, wih_all, whh_bd, b_all, wemb_p, bemb_p)
    return out[:, :, :nOut]


def init_params(key, nIn, nHidden, nOut):
    """PyTorch-shaped parameters for nn.LSTM(nIn, nHidden, bidirectional=True)
    + nn.Linear(2*nHidden, nOut), plus fused layouts consumed by the kernel."""
    H = nHidden
    bound = 1.0 / math.sqrt(H)
    ks = jax.random.split(key, 10)
    u = lambda k, shp, b: jax.random.uniform(k, shp, jnp.float32, -b, b)

    wih_f = u(ks[0], (4 * H, nIn), bound)
    whh_f = u(ks[1], (4 * H, H), bound)
    bih_f = u(ks[2], (4 * H,), bound)
    bhh_f = u(ks[3], (4 * H,), bound)
    wih_b = u(ks[4], (4 * H, nIn), bound)
    whh_b = u(ks[5], (4 * H, H), bound)
    bih_b = u(ks[6], (4 * H,), bound)
    bhh_b = u(ks[7], (4 * H,), bound)

    bound_e = 1.0 / math.sqrt(2 * H)
    wemb = u(ks[8], (nOut, 2 * H), bound_e)
    bemb = u(ks[9], (nOut,), bound_e)

    b_f = (bih_f + bhh_f).reshape(1, 4 * H)
    b_b = (bih_b + bhh_b).reshape(1, 4 * H)

    # Block-diagonal recurrent weight: [h_f | h_b] @ whh_bd = [h_f@Whh_f^T | h_b@Whh_b^T]
    whh_bd = jnp.zeros((2 * H, 8 * H), jnp.float32)
    whh_bd = whh_bd.at[:H, :4 * H].set(whh_f.T)
    whh_bd = whh_bd.at[H:, 4 * H:].set(whh_b.T)

    return {
        # per-direction layouts (pure-JAX reference)
        "wih_f_t": wih_f.T, "whh_f_t": whh_f.T, "b_f": b_f,
        "wih_b_t": wih_b.T, "whh_b_t": whh_b.T, "b_b": b_b,
        # fused layouts consumed by the kernel
        "wih_all": jnp.concatenate([wih_f.T, wih_b.T], axis=1),   # (nIn, 8H)
        "whh_bd": whh_bd,                                         # (2H, 8H)
        "b_all": jnp.concatenate([b_f, b_b], axis=1),             # (1, 8H)
        "wemb_t": wemb.T,                                         # (2H, nOut)
        "bemb": bemb.reshape(1, nOut),
    }


def reference_bilstm(x, params):
    """Pure-JAX f32 reference with identical PyTorch LSTM semantics."""
    T, B, _ = x.shape
    H = params["whh_f_t"].shape[0]

    def run(wihT, whhT, b, reverse):
        h = jnp.zeros((B, H), jnp.float32)
        c = jnp.zeros((B, H), jnp.float32)
        outs = [None] * T
        ts = range(T - 1, -1, -1) if reverse else range(T)
        for t in ts:
            gates = x[t] @ wihT + h @ whhT + b
            i_g = jax.nn.sigmoid(gates[:, 0 * H:1 * H])
            f_g = jax.nn.sigmoid(gates[:, 1 * H:2 * H])
            g_g = jnp.tanh(gates[:, 2 * H:3 * H])
            o_g = jax.nn.sigmoid(gates[:, 3 * H:4 * H])
            c = f_g * c + i_g * g_g
            h = o_g * jnp.tanh(c)
            outs[t] = h
        return jnp.stack(outs, axis=0)

    rf = run(params["wih_f_t"], params["whh_f_t"], params["b_f"], False)
    rb = run(params["wih_b_t"], params["whh_b_t"], params["b_b"], True)
    rec = jnp.concatenate([rf, rb], axis=-1)                 # (T, B, 2H)
    nOut = params["wemb_t"].shape[1]
    out = rec.reshape(T * B, 2 * H) @ params["wemb_t"] + params["bemb"]
    return out.reshape(T, B, nOut)


if __name__ == "__main__":
    # Small shapes consistent with BidirectionalLSTM(nIn, nHidden, nOut)
    T, B, nIn, nHidden, nOut = 8, 2, 32, 32, 16

    key = jax.random.PRNGKey(0)
    k_x, k_p = jax.random.split(key)
    x = jax.random.normal(k_x, (T, B, nIn), jnp.float32)
    params = init_params(k_p, nIn, nHidden, nOut)

    ref = reference_bilstm(x, params)

    # f32 validation path (exact match to the f32 reference).
    out = jax.block_until_ready(bidirectional_lstm(x, params))
    assert out.shape == (T, B, nOut)
    err = jnp.max(jnp.abs(out - ref))
    assert jnp.allclose(out, ref, atol=1e-4, rtol=1e-4), f"f32 max abs err {err}"

    # bf16 matmul-operand path (production config): loosened tolerance.
    out_bf = jax.block_until_ready(
        bidirectional_lstm(x, params, compute_dtype=jnp.bfloat16))
    assert out_bf.shape == (T, B, nOut)
    err_bf = jnp.max(jnp.abs(out_bf - ref))
    assert jnp.allclose(out_bf, ref, atol=5e-2, rtol=0.0), f"bf16 max abs err {err_bf}"

    print("KERNEL_OK")
</pallas_src>

<mosaic_0001>
module attributes {stable_mosaic.version = 11 : i64} {
  func.func @bilstm_kernel(%arg0: i32, %arg1: memref<8x2x32xf32, #tpu.memory_space<vmem>>, %arg2: memref<32x256xf32, #tpu.memory_space<vmem>>, %arg3: memref<64x256xf32, #tpu.memory_space<vmem>>, %arg4: memref<1x256xf32, #tpu.memory_space<vmem>>, %arg5: memref<64x128xf32, #tpu.memory_space<vmem>>, %arg6: memref<1x128xf32, #tpu.memory_space<vmem>>, %arg7: memref<8x2x128xf32, #tpu.memory_space<vmem>>, %arg8: memref<8x2x128xf32, #tpu.memory_space<vmem>>, %arg9: memref<8x2x128xf32, #tpu.memory_space<vmem>>, %arg10: memref<8x2x32xf32, #tpu.memory_space<vmem>>, %arg11: memref<8x2x32xf32, #tpu.memory_space<vmem>>) attributes {dimension_semantics = [#tpu.dimension_semantics<parallel>], iteration_bounds = array<i64: 1>, scalar_prefetch = 0 : i64, scratch_operands = 4 : i64, tpu.core_type = #tpu.core_type<tc>, window_params = [{transform_indices = @transform_0, window_bounds = array<i64: 8, 2, 32>}, {pipeline_mode = #tpu.pipeline_mode<synchronous>, transform_indices = @transform_1, window_bounds = array<i64: 32, 256>}, {pipeline_mode = #tpu.pipeline_mode<synchronous>, transform_indices = @transform_2, window_bounds = array<i64: 64, 256>}, {pipeline_mode = #tpu.pipeline_mode<synchronous>, transform_indices = @transform_3, window_bounds = array<i64: 1, 256>}, {pipeline_mode = #tpu.pipeline_mode<synchronous>, transform_indices = @transform_4, window_bounds = array<i64: 64, 128>}, {pipeline_mode = #tpu.pipeline_mode<synchronous>, transform_indices = @transform_5, window_bounds = array<i64: 1, 128>}, {transform_indices = @transform_6, window_bounds = array<i64: 8, 2, 128>}]} {
    %c0 = arith.constant 0 : index
    %c0_0 = arith.constant 0 : index
    %c0_1 = arith.constant 0 : index
    %0 = vector.load %arg1[%c0, %c0_0, %c0_1] : memref<8x2x32xf32, #tpu.memory_space<vmem>>, vector<8x2x32xf32>
    %1 = vector.shape_cast %0 : vector<8x2x32xf32> to vector<16x32xf32>
    %c0_2 = arith.constant 0 : index
    %c0_3 = arith.constant 0 : index
    %2 = vector.load %arg2[%c0_2, %c0_3] : memref<32x256xf32, #tpu.memory_space<vmem>>, vector<32x256xf32>
    %cst = arith.constant dense<0.000000e+00> : vector<16x256xf32>
    %3 = tpu.matmul %1, %2, %cst {dimension_numbers = #tpu.dot_dimension_numbers<[1], [0], [0], [1], [0, 0, 1, 1], [], []>} : vector<16x32xf32>, vector<32x256xf32>, vector<16x256xf32> -> vector<16x256xf32>
    %c0_4 = arith.constant 0 : index
    %c0_5 = arith.constant 0 : index
    %4 = vector.load %arg4[%c0_4, %c0_5] : memref<1x256xf32, #tpu.memory_space<vmem>>, vector<1x256xf32>
    %5 = vector.broadcast %4 : vector<1x256xf32> to vector<16x256xf32>
    %6 = arith.addf %3, %5 : vector<16x256xf32>
    %7 = vector.extract_strided_slice %6 {offsets = [0, 0], sizes = [16, 128], strides = [1, 1]} : vector<16x256xf32> to vector<16x128xf32>
    %8 = vector.shape_cast %7 : vector<16x128xf32> to vector<8x2x128xf32>
    %c0_6 = arith.constant 0 : index
    %c0_7 = arith.constant 0 : index
    %c0_8 = arith.constant 0 : index
    %9 = vector.load %arg8[%c0_6, %c0_7, %c0_8] : memref<8x2x128xf32, #tpu.memory_space<vmem>>, vector<8x2x128xf32>
    tpu.vector_store %arg8[%c0_6, %c0_7, %c0_8], %8 {strides = array<i32>} : memref<8x2x128xf32, #tpu.memory_space<vmem>>, vector<8x2x128xf32>,
    %10 = vector.extract_strided_slice %6 {offsets = [0, 128], sizes = [16, 128], strides = [1, 1]} : vector<16x256xf32> to vector<16x128xf32>
    %11 = vector.shape_cast %10 : vector<16x128xf32> to vector<8x2x128xf32>
    %c0_9 = arith.constant 0 : index
    %c0_10 = arith.constant 0 : index
    %c0_11 = arith.constant 0 : index
    %12 = vector.load %arg9[%c0_9, %c0_10, %c0_11] : memref<8x2x128xf32, #tpu.memory_space<vmem>>, vector<8x2x128xf32>
    tpu.vector_store %arg9[%c0_9, %c0_10, %c0_11], %11 {strides = array<i32>} : memref<8x2x128xf32, #tpu.memory_space<vmem>>, vector<8x2x128xf32>,
    %c0_12 = arith.constant 0 : index
    %c0_13 = arith.constant 0 : index
    %13 = vector.load %arg3[%c0_12, %c0_13] : memref<64x256xf32, #tpu.memory_space<vmem>>, vector<64x256xf32>
    %cst_14 = arith.constant 0.000000e+00 : f32
    %14 = vector.broadcast %cst_14 : f32 to vector<2x32xf32>
    %c0_i32 = arith.constant 0 : i32
    %c7_i32 = arith.constant 7 : i32
    %15 = arith.subi %c7_i32, %c0_i32 : i32
    %16 = tpu.concatenate %14, %14 in 1 : vector<2x32xf32>, vector<2x32xf32> -> vector<2x64xf32>
    %cst_15 = arith.constant dense<0.000000e+00> : vector<2x256xf32>
    %17 = tpu.matmul %16, %13, %cst_15 {dimension_numbers = #tpu.dot_dimension_numbers<[1], [0], [0], [1], [0, 0, 1, 1], [], []>} : vector<2x64xf32>, vector<64x256xf32>, vector<2x256xf32> -> vector<2x256xf32>
    %18 = vector.extract_strided_slice %17 {offsets = [0, 0], sizes = [2, 128], strides = [1, 1]} : vector<2x256xf32> to vector<2x128xf32>
    %19 = arith.index_cast %c0_i32 : i32 to index
    %c0_16 = arith.constant 0 : index
    %c0_17 = arith.constant 0 : index
    %20 = vector.load %arg8[%19, %c0_16, %c0_17] : memref<8x2x128xf32, #tpu.memory_space<vmem>>, vector<1x2x128xf32>
    %21 = vector.shape_cast %20 : vector<1x2x128xf32> to vector<2x128xf32>
    %22 = arith.addf %18, %21 : vector<2x128xf32>
    %23 = vector.extract_strided_slice %17 {offsets = [0, 128], sizes = [2, 128], strides = [1, 1]} : vector<2x256xf32> to vector<2x128xf32>
    %24 = arith.index_cast %15 : i32 to index
    %c0_18 = arith.constant 0 : index
    %c0_19 = arith.constant 0 : index
    %25 = vector.load %arg9[%24, %c0_18, %c0_19] : memref<8x2x128xf32, #tpu.memory_space<vmem>>, vector<1x2x128xf32>
    %26 = vector.shape_cast %25 : vector<1x2x128xf32> to vector<2x128xf32>
    %27 = arith.addf %23, %26 : vector<2x128xf32>
    %28 = vector.extract_strided_slice %22 {offsets = [0, 0], sizes = [2, 32], strides = [1, 1]} : vector<2x128xf32> to vector<2x32xf32>
    %29 = arith.negf %28 : vector<2x32xf32>
    %30 = math.exp %29 : vector<2x32xf32>
    %cst_20 = arith.constant 1.000000e+00 : f32
    %31 = vector.broadcast %cst_20 : f32 to vector<2x32xf32>
    %32 = arith.addf %31, %30 : vector<2x32xf32>
    %33 = arith.divf %31, %32 : vector<2x32xf32>
    %34 = vector.extract_strided_slice %22 {offsets = [0, 32], sizes = [2, 32], strides = [1, 1]} : vector<2x128xf32> to vector<2x32xf32>
    %35 = arith.negf %34 : vector<2x32xf32>
    %36 = math.exp %35 : vector<2x32xf32>
    %cst_21 = arith.constant 1.000000e+00 : f32
    %37 = vector.broadcast %cst_21 : f32 to vector<2x32xf32>
    %38 = arith.addf %37, %36 : vector<2x32xf32>
    %39 = arith.divf %37, %38 : vector<2x32xf32>
    %40 = vector.extract_strided_slice %22 {offsets = [0, 64], sizes = [2, 32], strides = [1, 1]} : vector<2x128xf32> to vector<2x32xf32>
    %41 = math.tanh %40 : vector<2x32xf32>
    %42 = vector.extract_strided_slice %22 {offsets = [0, 96], sizes = [2, 32], strides = [1, 1]} : vector<2x128xf32> to vector<2x32xf32>
    %43 = arith.negf %42 : vector<2x32xf32>
    %44 = math.exp %43 : vector<2x32xf32>
    %cst_22 = arith.constant 1.000000e+00 : f32
    %45 = vector.broadcast %cst_22 : f32 to vector<2x32xf32>
    %46 = arith.addf %45, %44 : vector<2x32xf32>
    %47 = arith.divf %45, %46 : vector<2x32xf32>
    %48 = arith.mulf %39, %14 : vector<2x32xf32>
    %49 = arith.mulf %33, %41 : vector<2x32xf32>
    %50 = arith.addf %48, %49 : vector<2x32xf32>
    %51 = math.tanh %50 : vector<2x32xf32>
    %52 = arith.mulf %47, %51 : vector<2x32xf32>
    %53 = vector.extract_strided_slice %27 {offsets = [0, 0], sizes = [2, 32], strides = [1, 1]} : vector<2x128xf32> to vector<2x32xf32>
    %54 = arith.negf %53 : vector<2x32xf32>
    %55 = math.exp %54 : vector<2x32xf32>
    %cst_23 = arith.constant 1.000000e+00 : f32
    %56 = vector.broadcast %cst_23 : f32 to vector<2x32xf32>
    %57 = arith.addf %56, %55 : vector<2x32xf32>
    %58 = arith.divf %56, %57 : vector<2x32xf32>
    %59 = vector.extract_strided_slice %27 {offsets = [0, 32], sizes = [2, 32], strides = [1, 1]} : vector<2x128xf32> to vector<2x32xf32>
    %60 = arith.negf %59 : vector<2x32xf32>
    %61 = math.exp %60 : vector<2x32xf32>
    %cst_24 = arith.constant 1.000000e+00 : f32
    %62 = vector.broadcast %cst_24 : f32 to vector<2x32xf32>
    %63 = arith.addf %62, %61 : vector<2x32xf32>
    %64 = arith.divf %62, %63 : vector<2x32xf32>
    %65 = vector.extract_strided_slice %27 {offsets = [0, 64], sizes = [2, 32], strides = [1, 1]} : vector<2x128xf32> to vector<2x32xf32>
    %66 = math.tanh %65 : vector<2x32xf32>
    %67 = vector.extract_strided_slice %27 {offsets = [0, 96], sizes = [2, 32], strides = [1, 1]} : vector<2x128xf32> to vector<2x32xf32>
    %68 = arith.negf %67 : vector<2x32xf32>
    %69 = math.exp %68 : vector<2x32xf32>
    %cst_25 = arith.constant 1.000000e+00 : f32
    %70 = vector.broadcast %cst_25 : f32 to vector<2x32xf32>
    %71 = arith.addf %70, %69 : vector<2x32xf32>
    %72 = arith.divf %70, %71 : vector<2x32xf32>
    %73 = arith.mulf %64, %14 : vector<2x32xf32>
    %74 = arith.mulf %58, %66 : vector<2x32xf32>
    %75 = arith.addf %73, %74 : vector<2x32xf32>
    %76 = math.tanh %75 : vector<2x32xf32>
    %77 = arith.mulf %72, %76 : vector<2x32xf32>
    %78 = arith.index_cast %c0_i32 : i32 to index
    %c0_26 = arith.constant 0 : index
    %c0_27 = arith.constant 0 : index
    %79 = vector.load %arg10[%78, %c0_26, %c0_27] : memref<8x2x32xf32, #tpu.memory_space<vmem>>, vector<1x2x32xf32>
    %80 = vector.shape_cast %79 : vector<1x2x32xf32> to vector<2x32xf32>
    %81 = vector.shape_cast %52 : vector<2x32xf32> to vector<1x2x32xf32>
    tpu.vector_store %arg10[%78, %c0_26, %c0_27], %81 {strides = array<i32>} : memref<8x2x32xf32, #tpu.memory_space<vmem>>, vector<1x2x32xf32>,
    %82 = arith.index_cast %15 : i32 to index
    %c0_28 = arith.constant 0 : index
    %c0_29 = arith.constant 0 : index
    %83 = vector.load %arg11[%82, %c0_28, %c0_29] : memref<8x2x32xf32, #tpu.memory_space<vmem>>, vector<1x2x32xf32>
    %84 = vector.shape_cast %83 : vector<1x2x32xf32> to vector<2x32xf32>
    %85 = vector.shape_cast %77 : vector<2x32xf32> to vector<1x2x32xf32>
    tpu.vector_store %arg11[%82, %c0_28, %c0_29], %85 {strides = array<i32>} : memref<8x2x32xf32, #tpu.memory_space<vmem>>, vector<1x2x32xf32>,
    %c1_i32 = arith.constant 1 : i32
    %c7_i32_30 = arith.constant 7 : i32
    %86 = arith.subi %c7_i32_30, %c1_i32 : i32
    %87 = tpu.concatenate %52, %77 in 1 : vector<2x32xf32>, vector<2x32xf32> -> vector<2x64xf32>
    %cst_31 = arith.constant dense<0.000000e+00> : vector<2x256xf32>
    %88 = tpu.matmul %87, %13, %cst_31 {dimension_numbers = #tpu.dot_dimension_numbers<[1], [0], [0], [1], [0, 0, 1, 1], [], []>} : vector<2x64xf32>, vector<64x256xf32>, vector<2x256xf32> -> vector<2x256xf32>
    %89 = vector.extract_strided_slice %88 {offsets = [0, 0], sizes = [2, 128], strides = [1, 1]} : vector<2x256xf32> to vector<2x128xf32>
    %90 = arith.index_cast %c1_i32 : i32 to index
    %c0_32 = arith.constant 0 : index
    %c0_33 = arith.constant 0 : index
    %91 = vector.load %arg8[%90, %c0_32, %c0_33] : memref<8x2x128xf32, #tpu.memory_space<vmem>>, vector<1x2x128xf32>
    %92 = vector.shape_cast %91 : vector<1x2x128xf32> to vector<2x128xf32>
    %93 = arith.addf %89, %92 : vector<2x128xf32>
    %94 = vector.extract_strided_slice %88 {offsets = [0, 128], sizes = [2, 128], strides = [1, 1]} : vector<2x256xf32> to vector<2x128xf32>
    %95 = arith.index_cast %86 : i32 to index
    %c0_34 = arith.constant 0 : index
    %c0_35 = arith.constant 0 : index
    %96 = vector.load %arg9[%95, %c0_34, %c0_35] : memref<8x2x128xf32, #tpu.memory_space<vmem>>, vector<1x2x128xf32>
    %97 = vector.shape_cast %96 : vector<1x2x128xf32> to vector<2x128xf32>
    %98 = arith.addf %94, %97 : vector<2x128xf32>
    %99 = vector.extract_strided_slice %93 {offsets = [0, 0], sizes = [2, 32], strides = [1, 1]} : vector<2x128xf32> to vector<2x32xf32>
    %100 = arith.negf %99 : vector<2x32xf32>
    %101 = math.exp %100 : vector<2x32xf32>
    %cst_36 = arith.constant 1.000000e+00 : f32
    %102 = vector.broadcast %cst_36 : f32 to vector<2x32xf32>
    %103 = arith.addf %102, %101 : vector<2x32xf32>
    %104 = arith.divf %102, %103 : vector<2x32xf32>
    %105 = vector.extract_strided_slice %93 {offsets = [0, 32], sizes = [2, 32], strides = [1, 1]} : vector<2x128xf32> to vector<2x32xf32>
    %106 = arith.negf %105 : vector<2x32xf32>
    %107 = math.exp %106 : vector<2x32xf32>
    %cst_37 = arith.constant 1.000000e+00 : f32
    %108 = vector.broadcast %cst_37 : f32 to vector<2x32xf32>
    %109 = arith.addf %108, %107 : vector<2x32xf32>
    %110 = arith.divf %108, %109 : vector<2x32xf32>
    %111 = vector.extract_strided_slice %93 {offsets = [0, 64], sizes = [2, 32], strides = [1, 1]} : vector<2x128xf32> to vector<2x32xf32>
    %112 = math.tanh %111 : vector<2x32xf32>
    %113 = vector.extract_strided_slice %93 {offsets = [0, 96], sizes = [2, 32], strides = [1, 1]} : vector<2x128xf32> to vector<2x32xf32>
    %114 = arith.negf %113 : vector<2x32xf32>
    %115 = math.exp %114 : vector<2x32xf32>
    %cst_38 = arith.constant 1.000000e+00 : f32
    %116 = vector.broadcast %cst_38 : f32 to vector<2x32xf32>
    %117 = arith.addf %116, %115 : vector<2x32xf32>
    %118 = arith.divf %116, %117 : vector<2x32xf32>
    %119 = arith.mulf %110, %50 : vector<2x32xf32>
    %120 = arith.mulf %104, %112 : vector<2x32xf32>
    %121 = arith.addf %119, %120 : vector<2x32xf32>
    %122 = math.tanh %121 : vector<2x32xf32>
    %123 = arith.mulf %118, %122 : vector<2x32xf32>
    %124 = vector.extract_strided_slice %98 {offsets = [0, 0], sizes = [2, 32], strides = [1, 1]} : vector<2x128xf32> to vector<2x32xf32>
    %125 = arith.negf %124 : vector<2x32xf32>
    %126 = math.exp %125 : vector<2x32xf32>
    %cst_39 = arith.constant 1.000000e+00 : f32
    %127 = vector.broadcast %cst_39 : f32 to vector<2x32xf32>
    %128 = arith.addf %127, %126 : vector<2x32xf32>
    %129 = arith.divf %127, %128 : vector<2x32xf32>
    %130 = vector.extract_strided_slice %98 {offsets = [0, 32], sizes = [2, 32], strides = [1, 1]} : vector<2x128xf32> to vector<2x32xf32>
    %131 = arith.negf %130 : vector<2x32xf32>
    %132 = math.exp %131 : vector<2x32xf32>
    %cst_40 = arith.constant 1.000000e+00 : f32
    %133 = vector.broadcast %cst_40 : f32 to vector<2x32xf32>
    %134 = arith.addf %133, %132 : vector<2x32xf32>
    %135 = arith.divf %133, %134 : vector<2x32xf32>
    %136 = vector.extract_strided_slice %98 {offsets = [0, 64], sizes = [2, 32], strides = [1, 1]} : vector<2x128xf32> to vector<2x32xf32>
    %137 = math.tanh %136 : vector<2x32xf32>
    %138 = vector.extract_strided_slice %98 {offsets = [0, 96], sizes = [2, 32], strides = [1, 1]} : vector<2x128xf32> to vector<2x32xf32>
    %139 = arith.negf %138 : vector<2x32xf32>
    %140 = math.exp %139 : vector<2x32xf32>
    %cst_41 = arith.constant 1.000000e+00 : f32
    %141 = vector.broadcast %cst_41 : f32 to vector<2x32xf32>
    %142 = arith.addf %141, %140 : vector<2x32xf32>
    %143 = arith.divf %141, %142 : vector<2x32xf32>
    %144 = arith.mulf %135, %75 : vector<2x32xf32>
    %145 = arith.mulf %129, %137 : vector<2x32xf32>
    %146 = arith.addf %144, %145 : vector<2x32xf32>
    %147 = math.tanh %146 : vector<2x32xf32>
    %148 = arith.mulf %143, %147 : vector<2x32xf32>
    %149 = arith.index_cast %c1_i32 : i32 to index
    %c0_42 = arith.constant 0 : index
    %c0_43 = arith.constant 0 : index
    %150 = vector.load %arg10[%149, %c0_42, %c0_43] : memref<8x2x32xf32, #tpu.memory_space<vmem>>, vector<1x2x32xf32>
    %151 = vector.shape_cast %150 : vector<1x2x32xf32> to vector<2x32xf32>
    %152 = vector.shape_cast %123 : vector<2x32xf32> to vector<1x2x32xf32>
    tpu.vector_store %arg10[%149, %c0_42, %c0_43], %152 {strides = array<i32>} : memref<8x2x32xf32, #tpu.memory_space<vmem>>, vector<1x2x32xf32>,
    %153 = arith.index_cast %86 : i32 to index
    %c0_44 = arith.constant 0 : index
    %c0_45 = arith.constant 0 : index
    %154 = vector.load %arg11[%153, %c0_44, %c0_45] : memref<8x2x32xf32, #tpu.memory_space<vmem>>, vector<1x2x32xf32>
    %155 = vector.shape_cast %154 : vector<1x2x32xf32> to vector<2x32xf32>
    %156 = vector.shape_cast %148 : vector<2x32xf32> to vector<1x2x32xf32>
    tpu.vector_store %arg11[%153, %c0_44, %c0_45], %156 {strides = array<i32>} : memref<8x2x32xf32, #tpu.memory_space<vmem>>, vector<1x2x32xf32>,
    %c2_i32 = arith.constant 2 : i32
    %c7_i32_46 = arith.constant 7 : i32
    %157 = arith.subi %c7_i32_46, %c2_i32 : i32
    %158 = tpu.concatenate %123, %148 in 1 : vector<2x32xf32>, vector<2x32xf32> -> vector<2x64xf32>
    %cst_47 = arith.constant dense<0.000000e+00> : vector<2x256xf32>
    %159 = tpu.matmul %158, %13, %cst_47 {dimension_numbers = #tpu.dot_dimension_numbers<[1], [0], [0], [1], [0, 0, 1, 1], [], []>} : vector<2x64xf32>, vector<64x256xf32>, vector<2x256xf32> -> vector<2x256xf32>
    %160 = vector.extract_strided_slice %159 {offsets = [0, 0], sizes = [2, 128], strides = [1, 1]} : vector<2x256xf32> to vector<2x128xf32>
    %161 = arith.index_cast %c2_i32 : i32 to index
    %c0_48 = arith.constant 0 : index
    %c0_49 = arith.constant 0 : index
    %162 = vector.load %arg8[%161, %c0_48, %c0_49] : memref<8x2x128xf32, #tpu.memory_space<vmem>>, vector<1x2x128xf32>
    %163 = vector.shape_cast %162 : vector<1x2x128xf32> to vector<2x128xf32>
    %164 = arith.addf %160, %163 : vector<2x128xf32>
    %165 = vector.extract_strided_slice %159 {offsets = [0, 128], sizes = [2, 128], strides = [1, 1]} : vector<2x256xf32> to vector<2x128xf32>
    %166 = arith.index_cast %157 : i32 to index
    %c0_50 = arith.constant 0 : index
    %c0_51 = arith.constant 0 : index
    %167 = vector.load %arg9[%166, %c0_50, %c0_51] : memref<8x2x128xf32, #tpu.memory_space<vmem>>, vector<1x2x128xf32>
    %168 = vector.shape_cast %167 : vector<1x2x128xf32> to vector<2x128xf32>
    %169 = arith.addf %165, %168 : vector<2x128xf32>
    %170 = vector.extract_strided_slice %164 {offsets = [0, 0], sizes = [2, 32], strides = [1, 1]} : vector<2x128xf32> to vector<2x32xf32>
    %171 = arith.negf %170 : vector<2x32xf32>
    %172 = math.exp %171 : vector<2x32xf32>
    %cst_52 = arith.constant 1.000000e+00 : f32
    %173 = vector.broadcast %cst_52 : f32 to vector<2x32xf32>
    %174 = arith.addf %173, %172 : vector<2x32xf32>
    %175 = arith.divf %173, %174 : vector<2x32xf32>
    %176 = vector.extract_strided_slice %164 {offsets = [0, 32], sizes = [2, 32], strides = [1, 1]} : vector<2x128xf32> to vector<2x32xf32>
    %177 = arith.negf %176 : vector<2x32xf32>
    %178 = math.exp %177 : vector<2x32xf32>
    %cst_53 = arith.constant 1.000000e+00 : f32
    %179 = vector.broadcast %cst_53 : f32 to vector<2x32xf32>
    %180 = arith.addf %179, %178 : vector<2x32xf32>
    %181 = arith.divf %179, %180 : vector<2x32xf32>
    %182 = vector.extract_strided_slice %164 {offsets = [0, 64], sizes = [2, 32], strides = [1, 1]} : vector<2x128xf32> to vector<2x32xf32>
    %183 = math.tanh %182 : vector<2x32xf32>
    %184 = vector.extract_strided_slice %164 {offsets = [0, 96], sizes = [2, 32], strides = [1, 1]} : vector<2x128xf32> to vector<2x32xf32>
    %185 = arith.negf %184 : vector<2x32xf32>
    %186 = math.exp %185 : vector<2x32xf32>
    %cst_54 = arith.constant 1.000000e+00 : f32
    %187 = vector.broadcast %cst_54 : f32 to vector<2x32xf32>
    %188 = arith.addf %187, %186 : vector<2x32xf32>
    %189 = arith.divf %187, %188 : vector<2x32xf32>
    %190 = arith.mulf %181, %121 : vector<2x32xf32>
    %191 = arith.mulf %175, %183 : vector<2x32xf32>
    %192 = arith.addf %190, %191 : vector<2x32xf32>
    %193 = math.tanh %192 : vector<2x32xf32>
    %194 = arith.mulf %189, %193 : vector<2x32xf32>
    %195 = vector.extract_strided_slice %169 {offsets = [0, 0], sizes = [2, 32], strides = [1, 1]} : vector<2x128xf32> to vector<2x32xf32>
    %196 = arith.negf %195 : vector<2x32xf32>
    %197 = math.exp %196 : vector<2x32xf32>
    %cst_55 = arith.constant 1.000000e+00 : f32
    %198 = vector.broadcast %cst_55 : f32 to vector<2x32xf32>
    %199 = arith.addf %198, %197 : vector<2x32xf32>
    %200 = arith.divf %198, %199 : vector<2x32xf32>
    %201 = vector.extract_strided_slice %169 {offsets = [0, 32], sizes = [2, 32], strides = [1, 1]} : vector<2x128xf32> to vector<2x32xf32>
    %202 = arith.negf %201 : vector<2x32xf32>
    %203 = math.exp %202 : vector<2x32xf32>
    %cst_56 = arith.constant 1.000000e+00 : f32
    %204 = vector.broadcast %cst_56 : f32 to vector<2x32xf32>
    %205 = arith.addf %204, %203 : vector<2x32xf32>
    %206 = arith.divf %204, %205 : vector<2x32xf32>
    %207 = vector.extract_strided_slice %169 {offsets = [0, 64], sizes = [2, 32], strides = [1, 1]} : vector<2x128xf32> to vector<2x32xf32>
    %208 = math.tanh %207 : vector<2x32xf32>
    %209 = vector.extract_strided_slice %169 {offsets = [0, 96], sizes = [2, 32], strides = [1, 1]} : vector<2x128xf32> to vector<2x32xf32>
    %210 = arith.negf %209 : vector<2x32xf32>
    %211 = math.exp %210 : vector<2x32xf32>
    %cst_57 = arith.constant 1.000000e+00 : f32
    %212 = vector.broadcast %cst_57 : f32 to vector<2x32xf32>
    %213 = arith.addf %212, %211 : vector<2x32xf32>
    %214 = arith.divf %212, %213 : vector<2x32xf32>
    %215 = arith.mulf %206, %146 : vector<2x32xf32>
    %216 = arith.mulf %200, %208 : vector<2x32xf32>
    %217 = arith.addf %215, %216 : vector<2x32xf32>
    %218 = math.tanh %217 : vector<2x32xf32>
    %219 = arith.mulf %214, %218 : vector<2x32xf32>
    %220 = arith.index_cast %c2_i32 : i32 to index
    %c0_58 = arith.constant 0 : index
    %c0_59 = arith.constant 0 : index
    %221 = vector.load %arg10[%220, %c0_58, %c0_59] : memref<8x2x32xf32, #tpu.memory_space<vmem>>, vector<1x2x32xf32>
    %222 = vector.shape_cast %221 : vector<1x2x32xf32> to vector<2x32xf32>
    %223 = vector.shape_cast %194 : vector<2x32xf32> to vector<1x2x32xf32>
    tpu.vector_store %arg10[%220, %c0_58, %c0_59], %223 {strides = array<i32>} : memref<8x2x32xf32, #tpu.memory_space<vmem>>, vector<1x2x32xf32>,
    %224 = arith.index_cast %157 : i32 to index
    %c0_60 = arith.constant 0 : index
    %c0_61 = arith.constant 0 : index
    %225 = vector.load %arg11[%224, %c0_60, %c0_61] : memref<8x2x32xf32, #tpu.memory_space<vmem>>, vector<1x2x32xf32>
    %226 = vector.shape_cast %225 : vector<1x2x32xf32> to vector<2x32xf32>
    %227 = vector.shape_cast %219 : vector<2x32xf32> to vector<1x2x32xf32>
    tpu.vector_store %arg11[%224, %c0_60, %c0_61], %227 {strides = array<i32>} : memref<8x2x32xf32, #tpu.memory_space<vmem>>, vector<1x2x32xf32>,
    %c3_i32 = arith.constant 3 : i32
    %c7_i32_62 = arith.constant 7 : i32
    %228 = arith.subi %c7_i32_62, %c3_i32 : i32
    %229 = tpu.concatenate %194, %219 in 1 : vector<2x32xf32>, vector<2x32xf32> -> vector<2x64xf32>
    %cst_63 = arith.constant dense<0.000000e+00> : vector<2x256xf32>
    %230 = tpu.matmul %229, %13, %cst_63 {dimension_numbers = #tpu.dot_dimension_numbers<[1], [0], [0], [1], [0, 0, 1, 1], [], []>} : vector<2x64xf32>, vector<64x256xf32>, vector<2x256xf32> -> vector<2x256xf32>
    %231 = vector.extract_strided_slice %230 {offsets = [0, 0], sizes = [2, 128], strides = [1, 1]} : vector<2x256xf32> to vector<2x128xf32>
    %232 = arith.index_cast %c3_i32 : i32 to index
    %c0_64 = arith.constant 0 : index
    %c0_65 = arith.constant 0 : index
    %233 = vector.load %arg8[%232, %c0_64, %c0_65] : memref<8x2x128xf32, #tpu.memory_space<vmem>>, vector<1x2x128xf32>
    %234 = vector.shape_cast %233 : vector<1x2x128xf32> to vector<2x128xf32>
    %235 = arith.addf %231, %234 : vector<2x128xf32>
    %236 = vector.extract_strided_slice %230 {offsets = [0, 128], sizes = [2, 128], strides = [1, 1]} : vector<2x256xf32> to vector<2x128xf32>
    %237 = arith.index_cast %228 : i32 to index
    %c0_66 = arith.constant 0 : index
    %c0_67 = arith.constant 0 : index
    %238 = vector.load %arg9[%237, %c0_66, %c0_67] : memref<8x2x128xf32, #tpu.memory_space<vmem>>, vector<1x2x128xf32>
    %239 = vector.shape_cast %238 : vector<1x2x128xf32> to vector<2x128xf32>
    %240 = arith.addf %236, %239 : vector<2x128xf32>
    %241 = vector.extract_strided_slice %235 {offsets = [0, 0], sizes = [2, 32], strides = [1, 1]} : vector<2x128xf32> to vector<2x32xf32>
    %242 = arith.negf %241 : vector<2x32xf32>
    %243 = math.exp %242 : vector<2x32xf32>
    %cst_68 = arith.constant 1.000000e+00 : f32
    %244 = vector.broadcast %cst_68 : f32 to vector<2x32xf32>
    %245 = arith.addf %244, %243 : vector<2x32xf32>
    %246 = arith.divf %244, %245 : vector<2x32xf32>
    %247 = vector.extract_strided_slice %235 {offsets = [0, 32], sizes = [2, 32], strides = [1, 1]} : vector<2x128xf32> to vector<2x32xf32>
    %248 = arith.negf %247 : vector<2x32xf32>
    %249 = math.exp %248 : vector<2x32xf32>
    %cst_69 = arith.constant 1.000000e+00 : f32
    %250 = vector.broadcast %cst_69 : f32 to vector<2x32xf32>
    %251 = arith.addf %250, %249 : vector<2x32xf32>
    %252 = arith.divf %250, %251 : vector<2x32xf32>
    %253 = vector.extract_strided_slice %235 {offsets = [0, 64], sizes = [2, 32], strides = [1, 1]} : vector<2x128xf32> to vector<2x32xf32>
    %254 = math.tanh %253 : vector<2x32xf32>
    %255 = vector.extract_strided_slice %235 {offsets = [0, 96], sizes = [2, 32], strides = [1, 1]} : vector<2x128xf32> to vector<2x32xf32>
    %256 = arith.negf %255 : vector<2x32xf32>
    %257 = math.exp %256 : vector<2x32xf32>
    %cst_70 = arith.constant 1.000000e+00 : f32
    %258 = vector.broadcast %cst_70 : f32 to vector<2x32xf32>
    %259 = arith.addf %258, %257 : vector<2x32xf32>
    %260 = arith.divf %258, %259 : vector<2x32xf32>
    %261 = arith.mulf %252, %192 : vector<2x32xf32>
    %262 = arith.mulf %246, %254 : vector<2x32xf32>
    %263 = arith.addf %261, %262 : vector<2x32xf32>
    %264 = math.tanh %263 : vector<2x32xf32>
    %265 = arith.mulf %260, %264 : vector<2x32xf32>
    %266 = vector.extract_strided_slice %240 {offsets = [0, 0], sizes = [2, 32], strides = [1, 1]} : vector<2x128xf32> to vector<2x32xf32>
    %267 = arith.negf %266 : vector<2x32xf32>
    %268 = math.exp %267 : vector<2x32xf32>
    %cst_71 = arith.constant 1.000000e+00 : f32
    %269 = vector.broadcast %cst_71 : f32 to vector<2x32xf32>
    %270 = arith.addf %269, %268 : vector<2x32xf32>
    %271 = arith.divf %269, %270 : vector<2x32xf32>
    %272 = vector.extract_strided_slice %240 {offsets = [0, 32], sizes = [2, 32], strides = [1, 1]} : vector<2x128xf32> to vector<2x32xf32>
    %273 = arith.negf %272 : vector<2x32xf32>
    %274 = math.exp %273 : vector<2x32xf32>
    %cst_72 = arith.constant 1.000000e+00 : f32
    %275 = vector.broadcast %cst_72 : f32 to vector<2x32xf32>
    %276 = arith.addf %275, %274 : vector<2x32xf32>
    %277 = arith.divf %275, %276 : vector<2x32xf32>
    %278 = vector.extract_strided_slice %240 {offsets = [0, 64], sizes = [2, 32], strides = [1, 1]} : vector<2x128xf32> to vector<2x32xf32>
    %279 = math.tanh %278 : vector<2x32xf32>
    %280 = vector.extract_strided_slice %240 {offsets = [0, 96], sizes = [2, 32], strides = [1, 1]} : vector<2x128xf32> to vector<2x32xf32>
    %281 = arith.negf %280 : vector<2x32xf32>
    %282 = math.exp %281 : vector<2x32xf32>
    %cst_73 = arith.constant 1.000000e+00 : f32
    %283 = vector.broadcast %cst_73 : f32 to vector<2x32xf32>
    %284 = arith.addf %283, %282 : vector<2x32xf32>
    %285 = arith.divf %283, %284 : vector<2x32xf32>
    %286 = arith.mulf %277, %217 : vector<2x32xf32>
    %287 = arith.mulf %271, %279 : vector<2x32xf32>
    %288 = arith.addf %286, %287 : vector<2x32xf32>
    %289 = math.tanh %288 : vector<2x32xf32>
    %290 = arith.mulf %285, %289 : vector<2x32xf32>
    %291 = arith.index_cast %c3_i32 : i32 to index
    %c0_74 = arith.constant 0 : index
    %c0_75 = arith.constant 0 : index
    %292 = vector.load %arg10[%291, %c0_74, %c0_75] : memref<8x2x32xf32, #tpu.memory_space<vmem>>, vector<1x2x32xf32>
    %293 = vector.shape_cast %292 : vector<1x2x32xf32> to vector<2x32xf32>
    %294 = vector.shape_cast %265 : vector<2x32xf32> to vector<1x2x32xf32>
    tpu.vector_store %arg10[%291, %c0_74, %c0_75], %294 {strides = array<i32>} : memref<8x2x32xf32, #tpu.memory_space<vmem>>, vector<1x2x32xf32>,
    %295 = arith.index_cast %228 : i32 to index
    %c0_76 = arith.constant 0 : index
    %c0_77 = arith.constant 0 : index
    %296 = vector.load %arg11[%295, %c0_76, %c0_77] : memref<8x2x32xf32, #tpu.memory_space<vmem>>, vector<1x2x32xf32>
    %297 = vector.shape_cast %296 : vector<1x2x32xf32> to vector<2x32xf32>
    %298 = vector.shape_cast %290 : vector<2x32xf32> to vector<1x2x32xf32>
    tpu.vector_store %arg11[%295, %c0_76, %c0_77], %298 {strides = array<i32>} : memref<8x2x32xf32, #tpu.memory_space<vmem>>, vector<1x2x32xf32>,
    %c4_i32 = arith.constant 4 : i32
    %c7_i32_78 = arith.constant 7 : i32
    %299 = arith.subi %c7_i32_78, %c4_i32 : i32
    %300 = tpu.concatenate %265, %290 in 1 : vector<2x32xf32>, vector<2x32xf32> -> vector<2x64xf32>
    %cst_79 = arith.constant dense<0.000000e+00> : vector<2x256xf32>
    %301 = tpu.matmul %300, %13, %cst_79 {dimension_numbers = #tpu.dot_dimension_numbers<[1], [0], [0], [1], [0, 0, 1, 1], [], []>} : vector<2x64xf32>, vector<64x256xf32>, vector<2x256xf32> -> vector<2x256xf32>
    %302 = vector.extract_strided_slice %301 {offsets = [0, 0], sizes = [2, 128], strides = [1, 1]} : vector<2x256xf32> to vector<2x128xf32>
    %303 = arith.index_cast %c4_i32 : i32 to index
    %c0_80 = arith.constant 0 : index
    %c0_81 = arith.constant 0 : index
    %304 = vector.load %arg8[%303, %c0_80, %c0_81] : memref<8x2x128xf32, #tpu.memory_space<vmem>>, vector<1x2x128xf32>
    %305 = vector.shape_cast %304 : vector<1x2x128xf32> to vector<2x128xf32>
    %306 = arith.addf %302, %305 : vector<2x128xf32>
    %307 = vector.extract_strided_slice %301 {offsets = [0, 128], sizes = [2, 128], strides = [1, 1]} : vector<2x256xf32> to vector<2x128xf32>
    %308 = arith.index_cast %299 : i32 to index
    %c0_82 = arith.constant 0 : index
    %c0_83 = arith.constant 0 : index
    %309 = vector.load %arg9[%308, %c0_82, %c0_83] : memref<8x2x128xf32, #tpu.memory_space<vmem>>, vector<1x2x128xf32>
    %310 = vector.shape_cast %309 : vector<1x2x128xf32> to vector<2x128xf32>
    %311 = arith.addf %307, %310 : vector<2x128xf32>
    %312 = vector.extract_strided_slice %306 {offsets = [0, 0], sizes = [2, 32], strides = [1, 1]} : vector<2x128xf32> to vector<2x32xf32>
    %313 = arith.negf %312 : vector<2x32xf32>
    %314 = math.exp %313 : vector<2x32xf32>
    %cst_84 = arith.constant 1.000000e+00 : f32
    %315 = vector.broadcast %cst_84 : f32 to vector<2x32xf32>
    %316 = arith.addf %315, %314 : vector<2x32xf32>
    %317 = arith.divf %315, %316 : vector<2x32xf32>
    %318 = vector.extract_strided_slice %306 {offsets = [0, 32], sizes = [2, 32], strides = [1, 1]} : vector<2x128xf32> to vector<2x32xf32>
    %319 = arith.negf %318 : vector<2x32xf32>
    %320 = math.exp %319 : vector<2x32xf32>
    %cst_85 = arith.constant 1.000000e+00 : f32
    %321 = vector.broadcast %cst_85 : f32 to vector<2x32xf32>
    %322 = arith.addf %321, %320 : vector<2x32xf32>
    %323 = arith.divf %321, %322 : vector<2x32xf32>
    %324 = vector.extract_strided_slice %306 {offsets = [0, 64], sizes = [2, 32], strides = [1, 1]} : vector<2x128xf32> to vector<2x32xf32>
    %325 = math.tanh %324 : vector<2x32xf32>
    %326 = vector.extract_strided_slice %306 {offsets = [0, 96], sizes = [2, 32], strides = [1, 1]} : vector<2x128xf32> to vector<2x32xf32>
    %327 = arith.negf %326 : vector<2x32xf32>
    %328 = math.exp %327 : vector<2x32xf32>
    %cst_86 = arith.constant 1.000000e+00 : f32
    %329 = vector.broadcast %cst_86 : f32 to vector<2x32xf32>
    %330 = arith.addf %329, %328 : vector<2x32xf32>
    %331 = arith.divf %329, %330 : vector<2x32xf32>
    %332 = arith.mulf %323, %263 : vector<2x32xf32>
    %333 = arith.mulf %317, %325 : vector<2x32xf32>
    %334 = arith.addf %332, %333 : vector<2x32xf32>
    %335 = math.tanh %334 : vector<2x32xf32>
    %336 = arith.mulf %331, %335 : vector<2x32xf32>
    %337 = vector.extract_strided_slice %311 {offsets = [0, 0], sizes = [2, 32], strides = [1, 1]} : vector<2x128xf32> to vector<2x32xf32>
    %338 = arith.negf %337 : vector<2x32xf32>
    %339 = math.exp %338 : vector<2x32xf32>
    %cst_87 = arith.constant 1.000000e+00 : f32
    %340 = vector.broadcast %cst_87 : f32 to vector<2x32xf32>
    %341 = arith.addf %340, %339 : vector<2x32xf32>
    %342 = arith.divf %340, %341 : vector<2x32xf32>
    %343 = vector.extract_strided_slice %311 {offsets = [0, 32], sizes = [2, 32], strides = [1, 1]} : vector<2x128xf32> to vector<2x32xf32>
    %344 = arith.negf %343 : vector<2x32xf32>
    %345 = math.exp %344 : vector<2x32xf32>
    %cst_88 = arith.constant 1.000000e+00 : f32
    %346 = vector.broadcast %cst_88 : f32 to vector<2x32xf32>
    %347 = arith.addf %346, %345 : vector<2x32xf32>
    %348 = arith.divf %346, %347 : vector<2x32xf32>
    %349 = vector.extract_strided_slice %311 {offsets = [0, 64], sizes = [2, 32], strides = [1, 1]} : vector<2x128xf32> to vector<2x32xf32>
    %350 = math.tanh %349 : vector<2x32xf32>
    %351 = vector.extract_strided_slice %311 {offsets = [0, 96], sizes = [2, 32], strides = [1, 1]} : vector<2x128xf32> to vector<2x32xf32>
    %352 = arith.negf %351 : vector<2x32xf32>
    %353 = math.exp %352 : vector<2x32xf32>
    %cst_89 = arith.constant 1.000000e+00 : f32
    %354 = vector.broadcast %cst_89 : f32 to vector<2x32xf32>
    %355 = arith.addf %354, %353 : vector<2x32xf32>
    %356 = arith.divf %354, %355 : vector<2x32xf32>
    %357 = arith.mulf %348, %288 : vector<2x32xf32>
    %358 = arith.mulf %342, %350 : vector<2x32xf32>
    %359 = arith.addf %357, %358 : vector<2x32xf32>
    %360 = math.tanh %359 : vector<2x32xf32>
    %361 = arith.mulf %356, %360 : vector<2x32xf32>
    %362 = arith.index_cast %c4_i32 : i32 to index
    %c0_90 = arith.constant 0 : index
    %c0_91 = arith.constant 0 : index
    %363 = vector.load %arg10[%362, %c0_90, %c0_91] : memref<8x2x32xf32, #tpu.memory_space<vmem>>, vector<1x2x32xf32>
    %364 = vector.shape_cast %363 : vector<1x2x32xf32> to vector<2x32xf32>
    %365 = vector.shape_cast %336 : vector<2x32xf32> to vector<1x2x32xf32>
    tpu.vector_store %arg10[%362, %c0_90, %c0_91], %365 {strides = array<i32>} : memref<8x2x32xf32, #tpu.memory_space<vmem>>, vector<1x2x32xf32>,
    %366 = arith.index_cast %299 : i32 to index
    %c0_92 = arith.constant 0 : index
    %c0_93 = arith.constant 0 : index
    %367 = vector.load %arg11[%366, %c0_92, %c0_93] : memref<8x2x32xf32, #tpu.memory_space<vmem>>, vector<1x2x32xf32>
    %368 = vector.shape_cast %367 : vector<1x2x32xf32> to vector<2x32xf32>
    %369 = vector.shape_cast %361 : vector<2x32xf32> to vector<1x2x32xf32>
    tpu.vector_store %arg11[%366, %c0_92, %c0_93], %369 {strides = array<i32>} : memref<8x2x32xf32, #tpu.memory_space<vmem>>, vector<1x2x32xf32>,
    %c5_i32 = arith.constant 5 : i32
    %c7_i32_94 = arith.constant 7 : i32
    %370 = arith.subi %c7_i32_94, %c5_i32 : i32
    %371 = tpu.concatenate %336, %361 in 1 : vector<2x32xf32>, vector<2x32xf32> -> vector<2x64xf32>
    %cst_95 = arith.constant dense<0.000000e+00> : vector<2x256xf32>
    %372 = tpu.matmul %371, %13, %cst_95 {dimension_numbers = #tpu.dot_dimension_numbers<[1], [0], [0], [1], [0, 0, 1, 1], [], []>} : vector<2x64xf32>, vector<64x256xf32>, vector<2x256xf32> -> vector<2x256xf32>
    %373 = vector.extract_strided_slice %372 {offsets = [0, 0], sizes = [2, 128], strides = [1, 1]} : vector<2x256xf32> to vector<2x128xf32>
    %374 = arith.index_cast %c5_i32 : i32 to index
    %c0_96 = arith.constant 0 : index
    %c0_97 = arith.constant 0 : index
    %375 = vector.load %arg8[%374, %c0_96, %c0_97] : memref<8x2x128xf32, #tpu.memory_space<vmem>>, vector<1x2x128xf32>
    %376 = vector.shape_cast %375 : vector<1x2x128xf32> to vector<2x128xf32>
    %377 = arith.addf %373, %376 : vector<2x128xf32>
    %378 = vector.extract_strided_slice %372 {offsets = [0, 128], sizes = [2, 128], strides = [1, 1]} : vector<2x256xf32> to vector<2x128xf32>
    %379 = arith.index_cast %370 : i32 to index
    %c0_98 = arith.constant 0 : index
    %c0_99 = arith.constant 0 : index
    %380 = vector.load %arg9[%379, %c0_98, %c0_99] : memref<8x2x128xf32, #tpu.memory_space<vmem>>, vector<1x2x128xf32>
    %381 = vector.shape_cast %380 : vector<1x2x128xf32> to vector<2x128xf32>
    %382 = arith.addf %378, %381 : vector<2x128xf32>
    %383 = vector.extract_strided_slice %377 {offsets = [0, 0], sizes = [2, 32], strides = [1, 1]} : vector<2x128xf32> to vector<2x32xf32>
    %384 = arith.negf %383 : vector<2x32xf32>
    %385 = math.exp %384 : vector<2x32xf32>
    %cst_100 = arith.constant 1.000000e+00 : f32
    %386 = vector.broadcast %cst_100 : f32 to vector<2x32xf32>
    %387 = arith.addf %386, %385 : vector<2x32xf32>
    %388 = arith.divf %386, %387 : vector<2x32xf32>
    %389 = vector.extract_strided_slice %377 {offsets = [0, 32], sizes = [2, 32], strides = [1, 1]} : vector<2x128xf32> to vector<2x32xf32>
    %390 = arith.negf %389 : vector<2x32xf32>
    %391 = math.exp %390 : vector<2x32xf32>
    %cst_101 = arith.constant 1.000000e+00 : f32
    %392 = vector.broadcast %cst_101 : f32 to vector<2x32xf32>
    %393 = arith.addf %392, %391 : vector<2x32xf32>
    %394 = arith.divf %392, %393 : vector<2x32xf32>
    %395 = vector.extract_strided_slice %377 {offsets = [0, 64], sizes = [2, 32], strides = [1, 1]} : vector<2x128xf32> to vector<2x32xf32>
    %396 = math.tanh %395 : vector<2x32xf32>
    %397 = vector.extract_strided_slice %377 {offsets = [0, 96], sizes = [2, 32], strides = [1, 1]} : vector<2x128xf32> to vector<2x32xf32>
    %398 = arith.negf %397 : vector<2x32xf32>
    %399 = math.exp %398 : vector<2x32xf32>
    %cst_102 = arith.constant 1.000000e+00 : f32
    %400 = vector.broadcast %cst_102 : f32 to vector<2x32xf32>
    %401 = arith.addf %400, %399 : vector<2x32xf32>
    %402 = arith.divf %400, %401 : vector<2x32xf32>
    %403 = arith.mulf %394, %334 : vector<2x32xf32>
    %404 = arith.mulf %388, %396 : vector<2x32xf32>
    %405 = arith.addf %403, %404 : vector<2x32xf32>
    %406 = math.tanh %405 : vector<2x32xf32>
    %407 = arith.mulf %402, %406 : vector<2x32xf32>
    %408 = vector.extract_strided_slice %382 {offsets = [0, 0], sizes = [2, 32], strides = [1, 1]} : vector<2x128xf32> to vector<2x32xf32>
    %409 = arith.negf %408 : vector<2x32xf32>
    %410 = math.exp %409 : vector<2x32xf32>
    %cst_103 = arith.constant 1.000000e+00 : f32
    %411 = vector.broadcast %cst_103 : f32 to vector<2x32xf32>
    %412 = arith.addf %411, %410 : vector<2x32xf32>
    %413 = arith.divf %411, %412 : vector<2x32xf32>
    %414 = vector.extract_strided_slice %382 {offsets = [0, 32], sizes = [2, 32], strides = [1, 1]} : vector<2x128xf32> to vector<2x32xf32>
    %415 = arith.negf %414 : vector<2x32xf32>
    %416 = math.exp %415 : vector<2x32xf32>
    %cst_104 = arith.constant 1.000000e+00 : f32
    %417 = vector.broadcast %cst_104 : f32 to vector<2x32xf32>
    %418 = arith.addf %417, %416 : vector<2x32xf32>
    %419 = arith.divf %417, %418 : vector<2x32xf32>
    %420 = vector.extract_strided_slice %382 {offsets = [0, 64], sizes = [2, 32], strides = [1, 1]} : vector<2x128xf32> to vector<2x32xf32>
    %421 = math.tanh %420 : vector<2x32xf32>
    %422 = vector.extract_strided_slice %382 {offsets = [0, 96], sizes = [2, 32], strides = [1, 1]} : vector<2x128xf32> to vector<2x32xf32>
    %423 = arith.negf %422 : vector<2x32xf32>
    %424 = math.exp %423 : vector<2x32xf32>
    %cst_105 = arith.constant 1.000000e+00 : f32
    %425 = vector.broadcast %cst_105 : f32 to vector<2x32xf32>
    %426 = arith.addf %425, %424 : vector<2x32xf32>
    %427 = arith.divf %425, %426 : vector<2x32xf32>
    %428 = arith.mulf %419, %359 : vector<2x32xf32>
    %429 = arith.mulf %413, %421 : vector<2x32xf32>
    %430 = arith.addf %428, %429 : vector<2x32xf32>
    %431 = math.tanh %430 : vector<2x32xf32>
    %432 = arith.mulf %427, %431 : vector<2x32xf32>
    %433 = arith.index_cast %c5_i32 : i32 to index
    %c0_106 = arith.constant 0 : index
    %c0_107 = arith.constant 0 : index
    %434 = vector.load %arg10[%433, %c0_106, %c0_107] : memref<8x2x32xf32, #tpu.memory_space<vmem>>, vector<1x2x32xf32>
    %435 = vector.shape_cast %434 : vector<1x2x32xf32> to vector<2x32xf32>
    %436 = vector.shape_cast %407 : vector<2x32xf32> to vector<1x2x32xf32>
    tpu.vector_store %arg10[%433, %c0_106, %c0_107], %436 {strides = array<i32>} : memref<8x2x32xf32, #tpu.memory_space<vmem>>, vector<1x2x32xf32>,
    %437 = arith.index_cast %370 : i32 to index
    %c0_108 = arith.constant 0 : index
    %c0_109 = arith.constant 0 : index
    %438 = vector.load %arg11[%437, %c0_108, %c0_109] : memref<8x2x32xf32, #tpu.memory_space<vmem>>, vector<1x2x32xf32>
    %439 = vector.shape_cast %438 : vector<1x2x32xf32> to vector<2x32xf32>
    %440 = vector.shape_cast %432 : vector<2x32xf32> to vector<1x2x32xf32>
    tpu.vector_store %arg11[%437, %c0_108, %c0_109], %440 {strides = array<i32>} : memref<8x2x32xf32, #tpu.memory_space<vmem>>, vector<1x2x32xf32>,
    %c6_i32 = arith.constant 6 : i32
    %c7_i32_110 = arith.constant 7 : i32
    %441 = arith.subi %c7_i32_110, %c6_i32 : i32
    %442 = tpu.concatenate %407, %432 in 1 : vector<2x32xf32>, vector<2x32xf32> -> vector<2x64xf32>
    %cst_111 = arith.constant dense<0.000000e+00> : vector<2x256xf32>
    %443 = tpu.matmul %442, %13, %cst_111 {dimension_numbers = #tpu.dot_dimension_numbers<[1], [0], [0], [1], [0, 0, 1, 1], [], []>} : vector<2x64xf32>, vector<64x256xf32>, vector<2x256xf32> -> vector<2x256xf32>
    %444 = vector.extract_strided_slice %443 {offsets = [0, 0], sizes = [2, 128], strides = [1, 1]} : vector<2x256xf32> to vector<2x128xf32>
    %445 = arith.index_cast %c6_i32 : i32 to index
    %c0_112 = arith.constant 0 : index
    %c0_113 = arith.constant 0 : index
    %446 = vector.load %arg8[%445, %c0_112, %c0_113] : memref<8x2x128xf32, #tpu.memory_space<vmem>>, vector<1x2x128xf32>
    %447 = vector.shape_cast %446 : vector<1x2x128xf32> to vector<2x128xf32>
    %448 = arith.addf %444, %447 : vector<2x128xf32>
    %449 = vector.extract_strided_slice %443 {offsets = [0, 128], sizes = [2, 128], strides = [1, 1]} : vector<2x256xf32> to vector<2x128xf32>
    %450 = arith.index_cast %441 : i32 to index
    %c0_114 = arith.constant 0 : index
    %c0_115 = arith.constant 0 : index
    %451 = vector.load %arg9[%450, %c0_114, %c0_115] : memref<8x2x128xf32, #tpu.memory_space<vmem>>, vector<1x2x128xf32>
    %452 = vector.shape_cast %451 : vector<1x2x128xf32> to vector<2x128xf32>
    %453 = arith.addf %449, %452 : vector<2x128xf32>
    %454 = vector.extract_strided_slice %448 {offsets = [0, 0], sizes = [2, 32], strides = [1, 1]} : vector<2x128xf32> to vector<2x32xf32>
    %455 = arith.negf %454 : vector<2x32xf32>
    %456 = math.exp %455 : vector<2x32xf32>
    %cst_116 = arith.constant 1.000000e+00 : f32
    %457 = vector.broadcast %cst_116 : f32 to vector<2x32xf32>
    %458 = arith.addf %457, %456 : vector<2x32xf32>
    %459 = arith.divf %457, %458 : vector<2x32xf32>
    %460 = vector.extract_strided_slice %448 {offsets = [0, 32], sizes = [2, 32], strides = [1, 1]} : vector<2x128xf32> to vector<2x32xf32>
    %461 = arith.negf %460 : vector<2x32xf32>
    %462 = math.exp %461 : vector<2x32xf32>
    %cst_117 = arith.constant 1.000000e+00 : f32
    %463 = vector.broadcast %cst_117 : f32 to vector<2x32xf32>
    %464 = arith.addf %463, %462 : vector<2x32xf32>
    %465 = arith.divf %463, %464 : vector<2x32xf32>
    %466 = vector.extract_strided_slice %448 {offsets = [0, 64], sizes = [2, 32], strides = [1, 1]} : vector<2x128xf32> to vector<2x32xf32>
    %467 = math.tanh %466 : vector<2x32xf32>
    %468 = vector.extract_strided_slice %448 {offsets = [0, 96], sizes = [2, 32], strides = [1, 1]} : vector<2x128xf32> to vector<2x32xf32>
    %469 = arith.negf %468 : vector<2x32xf32>
    %470 = math.exp %469 : vector<2x32xf32>
    %cst_118 = arith.constant 1.000000e+00 : f32
    %471 = vector.broadcast %cst_118 : f32 to vector<2x32xf32>
    %472 = arith.addf %471, %470 : vector<2x32xf32>
    %473 = arith.divf %471, %472 : vector<2x32xf32>
    %474 = arith.mulf %465, %405 : vector<2x32xf32>
    %475 = arith.mulf %459, %467 : vector<2x32xf32>
    %476 = arith.addf %474, %475 : vector<2x32xf32>
    %477 = math.tanh %476 : vector<2x32xf32>
    %478 = arith.mulf %473, %477 : vector<2x32xf32>
    %479 = vector.extract_strided_slice %453 {offsets = [0, 0], sizes = [2, 32], strides = [1, 1]} : vector<2x128xf32> to vector<2x32xf32>
    %480 = arith.negf %479 : vector<2x32xf32>
    %481 = math.exp %480 : vector<2x32xf32>
    %cst_119 = arith.constant 1.000000e+00 : f32
    %482 = vector.broadcast %cst_119 : f32 to vector<2x32xf32>
    %483 = arith.addf %482, %481 : vector<2x32xf32>
    %484 = arith.divf %482, %483 : vector<2x32xf32>
    %485 = vector.extract_strided_slice %453 {offsets = [0, 32], sizes = [2, 32], strides = [1, 1]} : vector<2x128xf32> to vector<2x32xf32>
    %486 = arith.negf %485 : vector<2x32xf32>
    %487 = math.exp %486 : vector<2x32xf32>
    %cst_120 = arith.constant 1.000000e+00 : f32
    %488 = vector.broadcast %cst_120 : f32 to vector<2x32xf32>
    %489 = arith.addf %488, %487 : vector<2x32xf32>
    %490 = arith.divf %488, %489 : vector<2x32xf32>
    %491 = vector.extract_strided_slice %453 {offsets = [0, 64], sizes = [2, 32], strides = [1, 1]} : vector<2x128xf32> to vector<2x32xf32>
    %492 = math.tanh %491 : vector<2x32xf32>
    %493 = vector.extract_strided_slice %453 {offsets = [0, 96], sizes = [2, 32], strides = [1, 1]} : vector<2x128xf32> to vector<2x32xf32>
    %494 = arith.negf %493 : vector<2x32xf32>
    %495 = math.exp %494 : vector<2x32xf32>
    %cst_121 = arith.constant 1.000000e+00 : f32
    %496 = vector.broadcast %cst_121 : f32 to vector<2x32xf32>
    %497 = arith.addf %496, %495 : vector<2x32xf32>
    %498 = arith.divf %496, %497 : vector<2x32xf32>
    %499 = arith.mulf %490, %430 : vector<2x32xf32>
    %500 = arith.mulf %484, %492 : vector<2x32xf32>
    %501 = arith.addf %499, %500 : vector<2x32xf32>
    %502 = math.tanh %501 : vector<2x32xf32>
    %503 = arith.mulf %498, %502 : vector<2x32xf32>
    %504 = arith.index_cast %c6_i32 : i32 to index
    %c0_122 = arith.constant 0 : index
    %c0_123 = arith.constant 0 : index
    %505 = vector.load %arg10[%504, %c0_122, %c0_123] : memref<8x2x32xf32, #tpu.memory_space<vmem>>, vector<1x2x32xf32>
    %506 = vector.shape_cast %505 : vector<1x2x32xf32> to vector<2x32xf32>
    %507 = vector.shape_cast %478 : vector<2x32xf32> to vector<1x2x32xf32>
    tpu.vector_store %arg10[%504, %c0_122, %c0_123], %507 {strides = array<i32>} : memref<8x2x32xf32, #tpu.memory_space<vmem>>, vector<1x2x32xf32>,
    %508 = arith.index_cast %441 : i32 to index
    %c0_124 = arith.constant 0 : index
    %c0_125 = arith.constant 0 : index
    %509 = vector.load %arg11[%508, %c0_124, %c0_125] : memref<8x2x32xf32, #tpu.memory_space<vmem>>, vector<1x2x32xf32>
    %510 = vector.shape_cast %509 : vector<1x2x32xf32> to vector<2x32xf32>
    %511 = vector.shape_cast %503 : vector<2x32xf32> to vector<1x2x32xf32>
    tpu.vector_store %arg11[%508, %c0_124, %c0_125], %511 {strides = array<i32>} : memref<8x2x32xf32, #tpu.memory_space<vmem>>, vector<1x2x32xf32>,
    %c7_i32_126 = arith.constant 7 : i32
    %c7_i32_127 = arith.constant 7 : i32
    %512 = arith.subi %c7_i32_127, %c7_i32_126 : i32
    %513 = tpu.concatenate %478, %503 in 1 : vector<2x32xf32>, vector<2x32xf32> -> vector<2x64xf32>
    %cst_128 = arith.constant dense<0.000000e+00> : vector<2x256xf32>
    %514 = tpu.matmul %513, %13, %cst_128 {dimension_numbers = #tpu.dot_dimension_numbers<[1], [0], [0], [1], [0, 0, 1, 1], [], []>} : vector<2x64xf32>, vector<64x256xf32>, vector<2x256xf32> -> vector<2x256xf32>
    %515 = vector.extract_strided_slice %514 {offsets = [0, 0], sizes = [2, 128], strides = [1, 1]} : vector<2x256xf32> to vector<2x128xf32>
    %516 = arith.index_cast %c7_i32_126 : i32 to index
    %c0_129 = arith.constant 0 : index
    %c0_130 = arith.constant 0 : index
    %517 = vector.load %arg8[%516, %c0_129, %c0_130] : memref<8x2x128xf32, #tpu.memory_space<vmem>>, vector<1x2x128xf32>
    %518 = vector.shape_cast %517 : vector<1x2x128xf32> to vector<2x128xf32>
    %519 = arith.addf %515, %518 : vector<2x128xf32>
    %520 = vector.extract_strided_slice %514 {offsets = [0, 128], sizes = [2, 128], strides = [1, 1]} : vector<2x256xf32> to vector<2x128xf32>
    %521 = arith.index_cast %512 : i32 to index
    %c0_131 = arith.constant 0 : index
    %c0_132 = arith.constant 0 : index
    %522 = vector.load %arg9[%521, %c0_131, %c0_132] : memref<8x2x128xf32, #tpu.memory_space<vmem>>, vector<1x2x128xf32>
    %523 = vector.shape_cast %522 : vector<1x2x128xf32> to vector<2x128xf32>
    %524 = arith.addf %520, %523 : vector<2x128xf32>
    %525 = vector.extract_strided_slice %519 {offsets = [0, 0], sizes = [2, 32], strides = [1, 1]} : vector<2x128xf32> to vector<2x32xf32>
    %526 = arith.negf %525 : vector<2x32xf32>
    %527 = math.exp %526 : vector<2x32xf32>
    %cst_133 = arith.constant 1.000000e+00 : f32
    %528 = vector.broadcast %cst_133 : f32 to vector<2x32xf32>
    %529 = arith.addf %528, %527 : vector<2x32xf32>
    %530 = arith.divf %528, %529 : vector<2x32xf32>
    %531 = vector.extract_strided_slice %519 {offsets = [0, 32], sizes = [2, 32], strides = [1, 1]} : vector<2x128xf32> to vector<2x32xf32>
    %532 = arith.negf %531 : vector<2x32xf32>
    %533 = math.exp %532 : vector<2x32xf32>
    %cst_134 = arith.constant 1.000000e+00 : f32
    %534 = vector.broadcast %cst_134 : f32 to vector<2x32xf32>
    %535 = arith.addf %534, %533 : vector<2x32xf32>
    %536 = arith.divf %534, %535 : vector<2x32xf32>
    %537 = vector.extract_strided_slice %519 {offsets = [0, 64], sizes = [2, 32], strides = [1, 1]} : vector<2x128xf32> to vector<2x32xf32>
    %538 = math.tanh %537 : vector<2x32xf32>
    %539 = vector.extract_strided_slice %519 {offsets = [0, 96], sizes = [2, 32], strides = [1, 1]} : vector<2x128xf32> to vector<2x32xf32>
    %540 = arith.negf %539 : vector<2x32xf32>
    %541 = math.exp %540 : vector<2x32xf32>
    %cst_135 = arith.constant 1.000000e+00 : f32
    %542 = vector.broadcast %cst_135 : f32 to vector<2x32xf32>
    %543 = arith.addf %542, %541 : vector<2x32xf32>
    %544 = arith.divf %542, %543 : vector<2x32xf32>
    %545 = arith.mulf %536, %476 : vector<2x32xf32>
    %546 = arith.mulf %530, %538 : vector<2x32xf32>
    %547 = arith.addf %545, %546 : vector<2x32xf32>
    %548 = math.tanh %547 : vector<2x32xf32>
    %549 = arith.mulf %544, %548 : vector<2x32xf32>
    %550 = vector.extract_strided_slice %524 {offsets = [0, 0], sizes = [2, 32], strides = [1, 1]} : vector<2x128xf32> to vector<2x32xf32>
    %551 = arith.negf %550 : vector<2x32xf32>
    %552 = math.exp %551 : vector<2x32xf32>
    %cst_136 = arith.constant 1.000000e+00 : f32
    %553 = vector.broadcast %cst_136 : f32 to vector<2x32xf32>
    %554 = arith.addf %553, %552 : vector<2x32xf32>
    %555 = arith.divf %553, %554 : vector<2x32xf32>
    %556 = vector.extract_strided_slice %524 {offsets = [0, 32], sizes = [2, 32], strides = [1, 1]} : vector<2x128xf32> to vector<2x32xf32>
    %557 = arith.negf %556 : vector<2x32xf32>
    %558 = math.exp %557 : vector<2x32xf32>
    %cst_137 = arith.constant 1.000000e+00 : f32
    %559 = vector.broadcast %cst_137 : f32 to vector<2x32xf32>
    %560 = arith.addf %559, %558 : vector<2x32xf32>
    %561 = arith.divf %559, %560 : vector<2x32xf32>
    %562 = vector.extract_strided_slice %524 {offsets = [0, 64], sizes = [2, 32], strides = [1, 1]} : vector<2x128xf32> to vector<2x32xf32>
    %563 = math.tanh %562 : vector<2x32xf32>
    %564 = vector.extract_strided_slice %524 {offsets = [0, 96], sizes = [2, 32], strides = [1, 1]} : vector<2x128xf32> to vector<2x32xf32>
    %565 = arith.negf %564 : vector<2x32xf32>
    %566 = math.exp %565 : vector<2x32xf32>
    %cst_138 = arith.constant 1.000000e+00 : f32
    %567 = vector.broadcast %cst_138 : f32 to vector<2x32xf32>
    %568 = arith.addf %567, %566 : vector<2x32xf32>
    %569 = arith.divf %567, %568 : vector<2x32xf32>
    %570 = arith.mulf %561, %501 : vector<2x32xf32>
    %571 = arith.mulf %555, %563 : vector<2x32xf32>
    %572 = arith.addf %570, %571 : vector<2x32xf32>
    %573 = math.tanh %572 : vector<2x32xf32>
    %574 = arith.mulf %569, %573 : vector<2x32xf32>
    %575 = arith.index_cast %c7_i32_126 : i32 to index
    %c0_139 = arith.constant 0 : index
    %c0_140 = arith.constant 0 : index
    %576 = vector.load %arg10[%575, %c0_139, %c0_140] : memref<8x2x32xf32, #tpu.memory_space<vmem>>, vector<1x2x32xf32>
    %577 = vector.shape_cast %576 : vector<1x2x32xf32> to vector<2x32xf32>
    %578 = vector.shape_cast %549 : vector<2x32xf32> to vector<1x2x32xf32>
    tpu.vector_store %arg10[%575, %c0_139, %c0_140], %578 {strides = array<i32>} : memref<8x2x32xf32, #tpu.memory_space<vmem>>, vector<1x2x32xf32>,
    %579 = arith.index_cast %512 : i32 to index
    %c0_141 = arith.constant 0 : index
    %c0_142 = arith.constant 0 : index
    %580 = vector.load %arg11[%579, %c0_141, %c0_142] : memref<8x2x32xf32, #tpu.memory_space<vmem>>, vector<1x2x32xf32>
    %581 = vector.shape_cast %580 : vector<1x2x32xf32> to vector<2x32xf32>
    %582 = vector.shape_cast %574 : vector<2x32xf32> to vector<1x2x32xf32>
    tpu.vector_store %arg11[%579, %c0_141, %c0_142], %582 {strides = array<i32>} : memref<8x2x32xf32, #tpu.memory_space<vmem>>, vector<1x2x32xf32>,
    %c8_i32 = arith.constant 8 : i32
    %c0_143 = arith.constant 0 : index
    %c0_144 = arith.constant 0 : index
    %583 = vector.load %arg5[%c0_143, %c0_144] : memref<64x128xf32, #tpu.memory_space<vmem>>, vector<64x128xf32>
    %c0_145 = arith.constant 0 : index
    %c0_146 = arith.constant 0 : index
    %c0_147 = arith.constant 0 : index
    %584 = vector.load %arg10[%c0_145, %c0_146, %c0_147] : memref<8x2x32xf32, #tpu.memory_space<vmem>>, vector<8x2x32xf32>
    %585 = vector.shape_cast %584 : vector<8x2x32xf32> to vector<16x32xf32>
    %c0_148 = arith.constant 0 : index
    %c0_149 = arith.constant 0 : index
    %c0_150 = arith.constant 0 : index
    %586 = vector.load %arg11[%c0_148, %c0_149, %c0_150] : memref<8x2x32xf32, #tpu.memory_space<vmem>>, vector<8x2x32xf32>
    %587 = vector.shape_cast %586 : vector<8x2x32xf32> to vector<16x32xf32>
    %588 = vector.extract_strided_slice %583 {offsets = [0, 0], sizes = [32, 128], strides = [1, 1]} : vector<64x128xf32> to vector<32x128xf32>
    %cst_151 = arith.constant dense<0.000000e+00> : vector<16x128xf32>
    %589 = tpu.matmul %585, %588, %cst_151 {dimension_numbers = #tpu.dot_dimension_numbers<[1], [0], [0], [1], [0, 0, 1, 1], [], []>} : vector<16x32xf32>, vector<32x128xf32>, vector<16x128xf32> -> vector<16x128xf32>
    %590 = vector.extract_strided_slice %583 {offsets = [32, 0], sizes = [32, 128], strides = [1, 1]} : vector<64x128xf32> to vector<32x128xf32>
    %cst_152 = arith.constant dense<0.000000e+00> : vector<16x128xf32>
    %591 = tpu.matmul %587, %590, %cst_152 {dimension_numbers = #tpu.dot_dimension_numbers<[1], [0], [0], [1], [0, 0, 1, 1], [], []>} : vector<16x32xf32>, vector<32x128xf32>, vector<16x128xf32> -> vector<16x128xf32>
    %592 = arith.addf %589, %591 : vector<16x128xf32>
    %c0_153 = arith.constant 0 : index
    %c0_154 = arith.constant 0 : index
    %593 = vector.load %arg6[%c0_153, %c0_154] : memref<1x128xf32, #tpu.memory_space<vmem>>, vector<1x128xf32>
    %594 = vector.broadcast %593 : vector<1x128xf32> to vector<16x128xf32>
    %595 = arith.addf %592, %594 : vector<16x128xf32>
    %596 = vector.shape_cast %595 : vector<16x128xf32> to vector<8x2x128xf32>
    %c0_155 = arith.constant 0 : index
    %c0_156 = arith.constant 0 : index
    %c0_157 = arith.constant 0 : index
    %597 = vector.load %arg7[%c0_155, %c0_156, %c0_157] : memref<8x2x128xf32, #tpu.memory_space<vmem>>, vector<8x2x128xf32>
    tpu.vector_store %arg7[%c0_155, %c0_156, %c0_157], %596 {strides = array<i32>} : memref<8x2x128xf32, #tpu.memory_space<vmem>>, vector<8x2x128xf32>,
    return
  }
  func.func @transform_0(%arg0: i32) -> (i32, i32, i32) {
    %c0_i32 = arith.constant 0 : i32
    %c0_i32_0 = arith.constant 0 : i32
    %c0_i32_1 = arith.constant 0 : i32
    return %c0_i32, %arg0, %c0_i32_0 : i32, i32, i32
  }
  func.func @transform_1(%arg0: i32) -> (i32, i32) {
    %c0_i32 = arith.constant 0 : i32
    %c0_i32_0 = arith.constant 0 : i32
    %c0_i32_1 = arith.constant 0 : i32
    return %c0_i32, %c0_i32_0 : i32, i32
  }
  func.func @transform_2(%arg0: i32) -> (i32, i32) {
    %c0_i32 = arith.constant 0 : i32
    %c0_i32_0 = arith.constant 0 : i32
    %c0_i32_1 = arith.constant 0 : i32
    return %c0_i32, %c0_i32_0 : i32, i32
  }
  func.func @transform_3(%arg0: i32) -> (i32, i32) {
    %c0_i32 = arith.constant 0 : i32
    %c0_i32_0 = arith.constant 0 : i32
    %c0_i32_1 = arith.constant 0 : i32
    return %c0_i32, %c0_i32_0 : i32, i32
  }
  func.func @transform_4(%arg0: i32) -> (i32, i32) {
    %c0_i32 = arith.constant 0 : i32
    %c0_i32_0 = arith.constant 0 : i32
    %c0_i32_1 = arith.constant 0 : i32
    return %c0_i32, %c0_i32_0 : i32, i32
  }
  func.func @transform_5(%arg0: i32) -> (i32, i32) {
    %c0_i32 = arith.constant 0 : i32
    %c0_i32_0 = arith.constant 0 : i32
    %c0_i32_1 = arith.constant 0 : i32
    return %c0_i32, %c0_i32_0 : i32, i32
  }
  func.func @transform_6(%arg0: i32) -> (i32, i32, i32) {
    %c0_i32 = arith.constant 0 : i32
    %c0_i32_0 = arith.constant 0 : i32
    %c0_i32_1 = arith.constant 0 : i32
    return %c0_i32, %arg0, %c0_i32_0 : i32, i32, i32
  }
}

</mosaic_0001>

<llo_original>
// kernel: tpu_custom_call.1
$region0: #{tpu_custom_call.1}
  #allocation0 [shape = 'u32[]', space=smem, size = 0x4, offset = 0x4, fixed_abs, tag = 'smem constant byte address 0x4 - core index']
  #allocation1 [shape = 'u32[72,128]{1,0:T(1,128)}', space=vmem, size = 0x9000, scoped, tag = 'internal scratch']
  #allocation2 [shape = 'f32[8,2,128]{2,1,0:T(2,128)}', space=vmem, size = 0x2000, scoped, tag = 'scratch operand']
  #allocation3 [shape = 'f32[8,2,128]{2,1,0:T(2,128)}', space=vmem, size = 0x2000, scoped, tag = 'scratch operand']
  #allocation4 [shape = 'f32[8,2,32]{2,1,0:T(2,128)}', space=vmem, size = 0x2000, scoped, tag = 'scratch operand']
  #allocation5 [shape = 'f32[8,2,32]{2,1,0:T(2,128)}', space=vmem, size = 0x2000, scoped, tag = 'scratch operand']
  %s0 = inlined_call_operand.hbm [shape: f32[8,2,32], index: 0, kind: input, shape index: {}]
  %s1 = inlined_call_operand.hbm [shape: f32[32,256], index: 1, kind: input, shape index: {}]
  %s2 = inlined_call_operand.hbm [shape: f32[64,256], index: 2, kind: input, shape index: {}]
  %s3 = inlined_call_operand.vmem [shape: f32[1,256], index: 3, kind: input, shape index: {}]
  %s4 = inlined_call_operand.hbm [shape: f32[64,128], index: 4, kind: input, shape index: {}]
  %s5 = inlined_call_operand.vmem [shape: f32[1,128], index: 5, kind: input, shape index: {}]
  %s6 = inlined_call_operand.hbm [shape: f32[8,2,128], index: 6, kind: output, shape index: {}]
  %s7 = sld [smem:[#allocation0]]
  $region50: #{tpu_custom_call.1} parent=0
    _
  %s9 = ssub.s32 1, %s7
  %s10 = scalar_select 0, %s9, %s7
  $region1: #{tpu_custom_call.1} parent=0
    #allocation6 [shape = 'u8[8192]{0}', space=vmem, size = 0x2000, scoped, tag = 'input window, operand 0, single buffered']
    #allocation7 [shape = 's32[1]{0}', space=sflag, size = 0x4, scoped, tag = 'scoped memory for tpu_custom_call.1']
    #allocation8 [shape = 's32[1]{0}', space=sflag, size = 0x4, scoped, tag = 'scoped memory for tpu_custom_call.1']
    #allocation9 [shape = 'u8[32768]{0}', space=vmem, size = 0x8000, scoped, tag = 'input window, operand 1, single buffered']
    #allocation10 [shape = 's32[1]{0}', space=sflag, size = 0x4, scoped, tag = 'scoped memory for tpu_custom_call.1']
    #allocation11 [shape = 'u8[65536]{0}', space=vmem, size = 0x10000, scoped, tag = 'input window, operand 2, single buffered']
    #allocation12 [shape = 'u8[32768]{0}', space=vmem, size = 0x8000, scoped, tag = 'input window, operand 4, single buffered']
    #allocation13 [shape = 's32[1]{0}', space=sflag, size = 0x4, scoped, tag = 'scoped memory for tpu_custom_call.1']
    #allocation14 [shape = 'u8[8192]{0}', space=vmem, size = 0x2000, scoped, tag = 'output window, operand 0, single buffered']
    %11 = vsyncpa [#allocation7], 0
    %12 = vsyncpa [#allocation10], 0
    %13 = vsyncpa [#allocation13], 0
    %14 = vsyncpa [#allocation8], 0
    // Predicated region
    $region2: #{tpu_custom_call.1} parent=1 // pred_check
      _
    $region3: #{tpu_custom_call.1} parent=1 // pred_check_branch
      %16 = sbr.rel (0) target = $region5
    $region4: #{tpu_custom_call.1} parent=1 // pred_region
      %18 = vsyncadd [#allocation7], 0
      %s19 = sshll.u32 %s0, 4
      %s20 = int_to_ptr.hbm [resolvable:$true] %s19
      %s21 = sshll.u32 [#allocation6], 4
      %s22 = int_to_ptr.vmem [resolvable:$true] %s21
      %27 = dma.hbm_to_vmem [thread:$0]  %s20, 256, %s22, [#allocation7], 32, 32, 2
    $region5: #{tpu_custom_call.1} parent=1 // pred_fallthru
      _
    // Predicated region
    $region6: #{tpu_custom_call.1} parent=1 // pred_check
      _
    $region7: #{tpu_custom_call.1} parent=1 // pred_check_branch
      %29 = sbr.rel (0) target = $region9
    $region8: #{tpu_custom_call.1} parent=1 // pred_region
      %31 = vsyncadd [#allocation10], 0
      %s32 = sshll.u32 %s1, 4
      %s33 = int_to_ptr.hbm [resolvable:$true] %s32
      %s34 = sshll.u32 [#allocation9], 4
      %s35 = int_to_ptr.vmem [resolvable:$true] %s34
      %40 = dma.hbm_to_vmem [thread:$0]  %s33, 1024, %s35, [#allocation10], 256, 256, 16
    $region9: #{tpu_custom_call.1} parent=1 // pred_fallthru
      _
    // Predicated region
    $region10: #{tpu_custom_call.1} parent=1 // pred_check
      _
    $region11: #{tpu_custom_call.1} parent=1 // pred_check_branch
      %42 = sbr.rel (0) target = $region13
    $region12: #{tpu_custom_call.1} parent=1 // pred_region
      %44 = vsyncadd [#allocation10], 0
      %s45 = sshll.u32 %s2, 4
      %s46 = int_to_ptr.hbm [resolvable:$true] %s45
      %s47 = sshll.u32 [#allocation11], 4
      %s48 = int_to_ptr.vmem [resolvable:$true] %s47
      %53 = dma.hbm_to_vmem [thread:$0]  %s46, 2048, %s48, [#allocation10], 256, 256, 16
    $region13: #{tpu_custom_call.1} parent=1 // pred_fallthru
      _
    // Predicated region
    $region14: #{tpu_custom_call.1} parent=1 // pred_check
      _
    $region15: #{tpu_custom_call.1} parent=1 // pred_check_branch
      %55 = sbr.rel (0) target = $region17
    $region16: #{tpu_custom_call.1} parent=1 // pred_region
      _
    $region17: #{tpu_custom_call.1} parent=1 // pred_fallthru
      _
    // Predicated region
    $region18: #{tpu_custom_call.1} parent=1 // pred_check
      _
    $region19: #{tpu_custom_call.1} parent=1 // pred_check_branch
      %57 = sbr.rel (0) target = $region21
    $region20: #{tpu_custom_call.1} parent=1 // pred_region
      %59 = vsyncadd [#allocation13], 0
      %s60 = sshll.u32 %s4, 4
      %s61 = int_to_ptr.hbm [resolvable:$true] %s60
      %s62 = sshll.u32 [#allocation12], 4
      %s63 = int_to_ptr.vmem [resolvable:$true] %s62
      %68 = dma.hbm_to_vmem [thread:$0]  %s61, 1024, %s63, [#allocation13], 128, 128, 8
    $region21: #{tpu_custom_call.1} parent=1 // pred_fallthru
      _
    // Predicated region
    $region22: #{tpu_custom_call.1} parent=1 // pred_check
      _
    $region23: #{tpu_custom_call.1} parent=1 // pred_check_branch
      %70 = sbr.rel (0) target = $region25
    $region24: #{tpu_custom_call.1} parent=1 // pred_region
      _
    $region25: #{tpu_custom_call.1} parent=1 // pred_fallthru
      _
    // Predicated region
    $region26: #{tpu_custom_call.1} parent=1 // pred_check
      _
    $region27: #{tpu_custom_call.1} parent=1 // pred_check_branch
      %72 = sbr.rel (0) target = $region29
    $region28: #{tpu_custom_call.1} parent=1 // pred_region
      %74 = dma.done [#allocation7], 256
    $region29: #{tpu_custom_call.1} parent=1 // pred_fallthru
      _
    // Predicated region
    $region30: #{tpu_custom_call.1} parent=1 // pred_check
      _
    $region31: #{tpu_custom_call.1} parent=1 // pred_check_branch
      %76 = sbr.rel (0) target = $region33
    $region32: #{tpu_custom_call.1} parent=1 // pred_region
      %78 = dma.done [#allocation10], 1024
    $region33: #{tpu_custom_call.1} parent=1 // pred_fallthru
      _
    // Predicated region
    $region34: #{tpu_custom_call.1} parent=1 // pred_check
      _
    $region35: #{tpu_custom_call.1} parent=1 // pred_check_branch
      %80 = sbr.rel (0) target = $region37
    $region36: #{tpu_custom_call.1} parent=1 // pred_region
      %82 = dma.done [#allocation10], 2048
    $region37: #{tpu_custom_call.1} parent=1 // pred_fallthru
      _
    // Predicated region
    $region38: #{tpu_custom_call.1} parent=1 // pred_check
      _
    $region39: #{tpu_custom_call.1} parent=1 // pred_check_branch
      %84 = sbr.rel (0) target = $region41
    $region40: #{tpu_custom_call.1} parent=1 // pred_region
      %86 = dma.done [#allocation13], 1024
    $region41: #{tpu_custom_call.1} parent=1 // pred_fallthru
      _
    %v87 = vld [vmem:[#allocation6] sm:$0x3]
    %v88 = vld [vmem:[#allocation6 + $0x2] sm:$0x3]
    %v89 = vld [vmem:[#allocation6 + $0x4] sm:$0x3]
    %v90 = vld [vmem:[#allocation6 + $0x6] sm:$0x3]
    %v91 = vld [vmem:[#allocation6 + $0x8] sm:$0x3]
    %v92 = vld [vmem:[#allocation6 + $0xa] sm:$0x3]
    %v93 = vld [vmem:[#allocation6 + $0xc] sm:$0x3]
    %v94 = vld [vmem:[#allocation6 + $0xe] sm:$0x3]
    %v95 = vld [vmem:[#allocation9] sm:$0xff]
    %v96 = vld [vmem:[#allocation9 + $0x8] sm:$0xff]
    %v97 = vld [vmem:[#allocation9 + $0x10] sm:$0xff]
    %v98 = vld [vmem:[#allocation9 + $0x18] sm:$0xff]
    %v99 = vld [vmem:[#allocation9 + $0x20] sm:$0xff]
    %v100 = vld [vmem:[#allocation9 + $0x28] sm:$0xff]
    %v101 = vld [vmem:[#allocation9 + $0x30] sm:$0xff]
    %v102 = vld [vmem:[#allocation9 + $0x38] sm:$0xff]
    %v103 = vld [vmem:[%s3] sm:$0x3]
    %v105 = vperm.slane %v103, 0
    %v106 = vperm.slane %v103, 1
    %117 = vst [vmem:[#allocation1] ss:$4 sm:$0xff] %v87
    %s118 = scalar_lea.vmem [#allocation1], 1
    %119 = vst [vmem:[%s118] ss:$4 sm:$0xff] %v88
    %s120 = scalar_lea.vmem [#allocation1], 2
    %121 = vst [vmem:[%s120] ss:$4 sm:$0xff] %v89
    %s122 = scalar_lea.vmem [#allocation1], 3
    %123 = vst [vmem:[%s122] ss:$4 sm:$0xff] %v90
    %s124 = scalar_lea.vmem [#allocation1], 32
    %125 = vst [vmem:[%s124] ss:$4 sm:$0xff] %v91
    %s126 = scalar_lea.vmem [#allocation1], 33
    %127 = vst [vmem:[%s126] ss:$4 sm:$0xff] %v92
    %s128 = scalar_lea.vmem [#allocation1], 34
    %129 = vst [vmem:[%s128] ss:$4 sm:$0xff] %v93
    %s130 = scalar_lea.vmem [#allocation1], 35
    %131 = vst [vmem:[%s130] ss:$4 sm:$0xff] %v94
    %v132 = vld.sshfl [vmem:[#allocation1] sm:$0xff pattern:$0x73625140]
    %v133 = vld.sshfl [vmem:[#allocation1 + $0x20] sm:$0xff pattern:$0x73625140]
    %vm134 = vcmask 261120
    %v135 = vsel %vm134, %v132, 0
    %v137 = vsel %vm134, %v133, 0
    %139 = vmatpush.msra.mxu0 0.0
    %140 = vmatpush.msra.mxu0 0.0
    %141 = vmatpush.msra.mxu0 0.0
    %142 = vmatpush.msra.mxu0 0.0
    %143 = vmatpush.msra.mxu0 0.0
    %144 = vmatpush.msra.mxu0 0.0
    %145 = vmatpush.msra.mxu0 0.0
    %146 = vmatpush.msra.mxu0 0.0
    %147 = vmatpush.msra.mxu0 0.0
    %148 = vmatpush.msra.mxu0 0.0
    %149 = vmatpush.msra.mxu0 0.0
    %150 = vmatpush.msra.mxu0 0.0
    %151 = vmatpush.msra.mxu0 %v101
    %152 = vmatpush.msra.mxu0 %v99
    %153 = vmatpush.msra.mxu0 %v97
    %154 = vmatpush.msra.mxu0 %v95
    %155 = vmatmul.f32.gmra.mxu0 %v135
    %v156 = vpop.f32.mrf.mxu0
    %v157 = vadd.f32 %v105, %v156
    %158 = vmatmul.f32.gmra.mxu0 %v137
    %v159 = vpop.f32.mrf.mxu0
    %v160 = vadd.f32 %v105, %v159
    %161 = vdwg.mxu0
    %162 = vmatpush.msra.mxu0 0.0
    %163 = vmatpush.msra.mxu0 0.0
    %164 = vmatpush.msra.mxu0 0.0
    %165 = vmatpush.msra.mxu0 0.0
    %166 = vmatpush.msra.mxu0 0.0
    %167 = vmatpush.msra.mxu0 0.0
    %168 = vmatpush.msra.mxu0 0.0
    %169 = vmatpush.msra.mxu0 0.0
    %170 = vmatpush.msra.mxu0 0.0
    %171 = vmatpush.msra.mxu0 0.0
    %172 = vmatpush.msra.mxu0 0.0
    %173 = vmatpush.msra.mxu0 0.0
    %174 = vmatpush.msra.mxu0 %v102
    %175 = vmatpush.msra.mxu0 %v100
    %176 = vmatpush.msra.mxu0 %v98
    %177 = vmatpush.msra.mxu0 %v96
    %178 = vmatmul.f32.gmra.mxu0 %v135
    %v179 = vpop.f32.mrf.mxu0
    %v180 = vadd.f32 %v106, %v179
    %181 = vmatmul.f32.gmra.mxu0 %v137
    %v182 = vpop.f32.mrf.mxu0
    %v183 = vadd.f32 %v106, %v182
    %184 = vdwg.mxu0
    %v187 = vrot.slane %v157, 2
    %v188 = vrot.slane %v157, 4
    %v189 = vrot.slane %v157, 6
    %v190 = vrot.slane %v160, 2
    %v191 = vrot.slane %v160, 4
    %v192 = vrot.slane %v160, 6
    %199 = vst [vmem:[#allocation2] sm:$0x3] %v157
    %200 = vst [vmem:[#allocation2 + $0x2] sm:$0x3] %v187
    %201 = vst [vmem:[#allocation2 + $0x4] sm:$0x3] %v188
    %202 = vst [vmem:[#allocation2 + $0x6] sm:$0x3] %v189
    %203 = vst [vmem:[#allocation2 + $0x8] sm:$0x3] %v160
    %204 = vst [vmem:[#allocation2 + $0xa] sm:$0x3] %v190
    %205 = vst [vmem:[#allocation2 + $0xc] sm:$0x3] %v191
    %206 = vst [vmem:[#allocation2 + $0xe] sm:$0x3] %v192
    %v209 = vrot.slane %v180, 2
    %v210 = vrot.slane %v180, 4
    %v211 = vrot.slane %v180, 6
    %v212 = vrot.slane %v183, 2
    %v213 = vrot.slane %v183, 4
    %v214 = vrot.slane %v183, 6
    %221 = vst [vmem:[#allocation3] sm:$0x3] %v180
    %222 = vst [vmem:[#allocation3 + $0x2] sm:$0x3] %v209
    %223 = vst [vmem:[#allocation3 + $0x4] sm:$0x3] %v210
    %224 = vst [vmem:[#allocation3 + $0x6] sm:$0x3] %v211
    %225 = vst [vmem:[#allocation3 + $0x8] sm:$0x3] %v183
    %226 = vst [vmem:[#allocation3 + $0xa] sm:$0x3] %v212
    %227 = vst [vmem:[#allocation3 + $0xc] sm:$0x3] %v213
    %228 = vst [vmem:[#allocation3 + $0xe] sm:$0x3] %v214
    %v229 = vld [vmem:[#allocation11] sm:$0xff]
    %v230 = vld [vmem:[#allocation11 + $0x8] sm:$0xff]
    %v231 = vld [vmem:[#allocation11 + $0x10] sm:$0xff]
    %v232 = vld [vmem:[#allocation11 + $0x18] sm:$0xff]
    %v233 = vld [vmem:[#allocation11 + $0x20] sm:$0xff]
    %v234 = vld [vmem:[#allocation11 + $0x28] sm:$0xff]
    %v235 = vld [vmem:[#allocation11 + $0x30] sm:$0xff]
    %v236 = vld [vmem:[#allocation11 + $0x38] sm:$0xff]
    %v237 = vld [vmem:[#allocation11 + $0x40] sm:$0xff]
    %v238 = vld [vmem:[#allocation11 + $0x48] sm:$0xff]
    %v239 = vld [vmem:[#allocation11 + $0x50] sm:$0xff]
    %v240 = vld [vmem:[#allocation11 + $0x58] sm:$0xff]
    %v241 = vld [vmem:[#allocation11 + $0x60] sm:$0xff]
    %v242 = vld [vmem:[#allocation11 + $0x68] sm:$0xff]
    %v243 = vld [vmem:[#allocation11 + $0x70] sm:$0xff]
    %v244 = vld [vmem:[#allocation11 + $0x78] sm:$0xff]
    %vm245 = vcmask 523264
    %v247 = vsel %vm245, 0.0, 0
    %249 = vmatpush.msra.mxu0 0.0
    %250 = vmatpush.msra.mxu0 0.0
    %251 = vmatpush.msra.mxu0 0.0
    %252 = vmatpush.msra.mxu0 0.0
    %253 = vmatpush.msra.mxu0 0.0
    %254 = vmatpush.msra.mxu0 0.0
    %255 = vmatpush.msra.mxu0 0.0
    %256 = vmatpush.msra.mxu0 0.0
    %257 = vmatpush.msra.mxu0 %v243
    %258 = vmatpush.msra.mxu0 %v241
    %259 = vmatpush.msra.mxu0 %v239
    %260 = vmatpush.msra.mxu0 %v237
    %261 = vmatpush.msra.mxu0 %v235
    %262 = vmatpush.msra.mxu0 %v233
    %263 = vmatpush.msra.mxu0 %v231
    %264 = vmatpush.msra.mxu0 %v229
    %265 = vmatmul.f32.gmra.mxu0 %v247
    %v266 = vpop.f32.mrf.mxu0
    %v267 = vadd.f32 0.0, %v266
    %268 = vdwg.mxu0
    %269 = vmatpush.msra.mxu0 0.0
    %270 = vmatpush.msra.mxu0 0.0
    %271 = vmatpush.msra.mxu0 0.0
    %272 = vmatpush.msra.mxu0 0.0
    %273 = vmatpush.msra.mxu0 0.0
    %274 = vmatpush.msra.mxu0 0.0
    %275 = vmatpush.msra.mxu0 0.0
    %276 = vmatpush.msra.mxu0 0.0
    %277 = vmatpush.msra.mxu0 %v244
    %278 = vmatpush.msra.mxu0 %v242
    %279 = vmatpush.msra.mxu0 %v240
    %280 = vmatpush.msra.mxu0 %v238
    %281 = vmatpush.msra.mxu0 %v236
    %282 = vmatpush.msra.mxu0 %v234
    %283 = vmatpush.msra.mxu0 %v232
    %284 = vmatpush.msra.mxu0 %v230
    %285 = vmatmul.f32.gmra.mxu0 %v247
    %v286 = vpop.f32.mrf.mxu0
    %v287 = vadd.f32 0.0, %v286
    %288 = vdwg.mxu0
    %v289 = vld [vmem:[#allocation2] sm:$0x3]
    %v290 = vadd.f32 %v267, %v289
    %s291 = scalar_lea.vmem [#allocation3], 14
    %v292 = vld [vmem:[%s291] sm:$0x3]
    %v293 = vadd.f32 %v287, %v292
    %v294 = vxor.u32 %v290, 2147483648
    %v295 = vmul.f32 %v294, 1.442695
    %v296 = vpow.pop %v295
    %v297 = vadd.f32 %v296, 1.0
    %v298 = vrcp.pop %v297
    %v299 = vmul.f32 %v297, %v298
    %v300 = vsub.f32 1.0, %v299
    %v301 = vmul.f32 %v298, %v300
    %v302 = vadd.f32 %v298, %v301
    %vm303 = vweird.f32 %v297
    %vm304 = vweird.f32 %v298
    %vm305 = vmor %vm303, %vm304
    %v306 = vsel %vm305, %v298, %v302
    %v307 = vand.u32 2147483647, %v297
    %vm308 = vcmp.eq.f32.partialorder %v307, 8.507059e+37
    %v309 = vand.u32 %v297, 2147483648
    %v310 = vor.u32 1.1754944e-38, %v309
    %v311 = vsel %vm308, %v310, %v306
    %v312 = vmul.f32 1.0, %v311
    %v313 = vtanh.pop %v290
    %v314 = vmul.f32 %v312, 0.0
    %316 = vrot.lane.b32.xlu0 %v313, 64
    %v317 = vpop.permute.xlu0 %316
    %v319 = vmul.f32 %v312, %v317
    %321 = vrot.lane.b32.xlu0 %v319, 32
    %v322 = vpop.permute.xlu0 %321
    %v324 = vadd.f32 %v314, %v322
    %v325 = vtanh.pop %v324
    %327 = vrot.lane.b32.xlu0 %v325, 64
    %v328 = vpop.permute.xlu0 %327
    %v330 = vmul.f32 %v312, %v328
    %v331 = vxor.u32 %v293, 2147483648
    %v332 = vmul.f32 %v331, 1.442695
    %v333 = vpow.pop %v332
    %v334 = vadd.f32 %v333, 1.0
    %v335 = vrcp.pop %v334
    %v336 = vmul.f32 %v334, %v335
    %v337 = vsub.f32 1.0, %v336
    %v338 = vmul.f32 %v335, %v337
    %v339 = vadd.f32 %v335, %v338
    %vm340 = vweird.f32 %v334
    %vm341 = vweird.f32 %v335
    %vm342 = vmor %vm340, %vm341
    %v343 = vsel %vm342, %v335, %v339
    %v344 = vand.u32 2147483647, %v334
    %vm345 = vcmp.eq.f32.partialorder %v344, 8.507059e+37
    %v346 = vand.u32 %v334, 2147483648
    %v347 = vor.u32 1.1754944e-38, %v346
    %v348 = vsel %vm345, %v347, %v343
    %v349 = vmul.f32 1.0, %v348
    %v350 = vtanh.pop %v293
    %v351 = vmul.f32 %v349, 0.0
    %353 = vrot.lane.b32.xlu0 %v350, 64
    %v354 = vpop.permute.xlu0 %353
    %v356 = vmul.f32 %v349, %v354
    %358 = vrot.lane.b32.xlu0 %v356, 32
    %v359 = vpop.permute.xlu0 %358
    %v361 = vadd.f32 %v351, %v359
    %v362 = vtanh.pop %v361
    %364 = vrot.lane.b32.xlu0 %v362, 64
    %v365 = vpop.permute.xlu0 %364
    %v367 = vmul.f32 %v349, %v365
    %369 = vrot.lane.b32.xlu0 %v330, 32
    %v370 = vpop.permute.xlu0 %369
    %vm372 = vcmask 254976
    %373 = vst.msk [vmem:[#allocation4] sm:$0x3] %vm372, %v370
    %375 = vrot.lane.b32.xlu0 %v367, 32
    %v376 = vpop.permute.xlu0 %375
    %s378 = scalar_lea.vmem [#allocation5], 14
    %379 = vst.msk [vmem:[%s378] sm:$0x3] %vm372, %v376
    %380 = vrot.lane.b32.xlu0 %v367, 64
    %v381 = vpop.permute.xlu0 %380
    %v383 = vsel %vm134, %v370, %v381
    %v385 = vsel %vm245, %v383, 0
    %387 = vmatpush.msra.mxu0 0.0
    %388 = vmatpush.msra.mxu0 0.0
    %389 = vmatpush.msra.mxu0 0.0
    %390 = vmatpush.msra.mxu0 0.0
    %391 = vmatpush.msra.mxu0 0.0
    %392 = vmatpush.msra.mxu0 0.0
    %393 = vmatpush.msra.mxu0 0.0
    %394 = vmatpush.msra.mxu0 0.0
    %395 = vmatpush.msra.mxu0 %v243
    %396 = vmatpush.msra.mxu0 %v241
    %397 = vmatpush.msra.mxu0 %v239
    %398 = vmatpush.msra.mxu0 %v237
    %399 = vmatpush.msra.mxu0 %v235
    %400 = vmatpush.msra.mxu0 %v233
    %401 = vmatpush.msra.mxu0 %v231
    %402 = vmatpush.msra.mxu0 %v229
    %403 = vmatmul.f32.gmra.mxu0 %v385
    %v404 = vpop.f32.mrf.mxu0
    %v405 = vadd.f32 0.0, %v404
    %406 = vdwg.mxu0
    %407 = vmatpush.msra.mxu0 0.0
    %408 = vmatpush.msra.mxu0 0.0
    %409 = vmatpush.msra.mxu0 0.0
    %410 = vmatpush.msra.mxu0 0.0
    %411 = vmatpush.msra.mxu0 0.0
    %412 = vmatpush.msra.mxu0 0.0
    %413 = vmatpush.msra.mxu0 0.0
    %414 = vmatpush.msra.mxu0 0.0
    %415 = vmatpush.msra.mxu0 %v244
    %416 = vmatpush.msra.mxu0 %v242
    %417 = vmatpush.msra.mxu0 %v240
    %418 = vmatpush.msra.mxu0 %v238
    %419 = vmatpush.msra.mxu0 %v236
    %420 = vmatpush.msra.mxu0 %v234
    %421 = vmatpush.msra.mxu0 %v232
    %422 = vmatpush.msra.mxu0 %v230
    %423 = vmatmul.f32.gmra.mxu0 %v385
    %v424 = vpop.f32.mrf.mxu0
    %v425 = vadd.f32 0.0, %v424
    %426 = vdwg.mxu0
    %s427 = scalar_lea.vmem [#allocation2], 2
    %v428 = vld [vmem:[%s427] sm:$0x3]
    %v429 = vadd.f32 %v405, %v428
    %s430 = scalar_lea.vmem [#allocation3], 12
    %v431 = vld [vmem:[%s430] sm:$0x3]
    %v432 = vadd.f32 %v425, %v431
    %v433 = vxor.u32 %v429, 2147483648
    %v434 = vmul.f32 %v433, 1.442695
    %v435 = vpow.pop %v434
    %v436 = vadd.f32 %v435, 1.0
    %v437 = vrcp.pop %v436
    %v438 = vmul.f32 %v436, %v437
    %v439 = vsub.f32 1.0, %v438
    %v440 = vmul.f32 %v437, %v439
    %v441 = vadd.f32 %v437, %v440
    %vm442 = vweird.f32 %v436
    %vm443 = vweird.f32 %v437
    %vm444 = vmor %vm442, %vm443
    %v445 = vsel %vm444, %v437, %v441
    %v446 = vand.u32 2147483647, %v436
    %vm447 = vcmp.eq.f32.partialorder %v446, 8.507059e+37
    %v448 = vand.u32 %v436, 2147483648
    %v449 = vor.u32 1.1754944e-38, %v448
    %v450 = vsel %vm447, %v449, %v445
    %v451 = vmul.f32 1.0, %v450
    %v452 = vtanh.pop %v429
    %v453 = vmul.f32 %v451, %v324
    %455 = vrot.lane.b32.xlu0 %v452, 64
    %v456 = vpop.permute.xlu0 %455
    %v458 = vmul.f32 %v451, %v456
    %460 = vrot.lane.b32.xlu0 %v458, 32
    %v461 = vpop.permute.xlu0 %460
    %v463 = vadd.f32 %v453, %v461
    %v464 = vtanh.pop %v463
    %466 = vrot.lane.b32.xlu0 %v464, 64
    %v467 = vpop.permute.xlu0 %466
    %v469 = vmul.f32 %v451, %v467
    %v470 = vxor.u32 %v432, 2147483648
    %v471 = vmul.f32 %v470, 1.442695
    %v472 = vpow.pop %v471
    %v473 = vadd.f32 %v472, 1.0
    %v474 = vrcp.pop %v473
    %v475 = vmul.f32 %v473, %v474
    %v476 = vsub.f32 1.0, %v475
    %v477 = vmul.f32 %v474, %v476
    %v478 = vadd.f32 %v474, %v477
    %vm479 = vweird.f32 %v473
    %vm480 = vweird.f32 %v474
    %vm481 = vmor %vm479, %vm480
    %v482 = vsel %vm481, %v474, %v478
    %v483 = vand.u32 2147483647, %v473
    %vm484 = vcmp.eq.f32.partialorder %v483, 8.507059e+37
    %v485 = vand.u32 %v473, 2147483648
    %v486 = vor.u32 1.1754944e-38, %v485
    %v487 = vsel %vm484, %v486, %v482
    %v488 = vmul.f32 1.0, %v487
    %v489 = vtanh.pop %v432
    %v490 = vmul.f32 %v488, %v361
    %492 = vrot.lane.b32.xlu0 %v489, 64
    %v493 = vpop.permute.xlu0 %492
    %v495 = vmul.f32 %v488, %v493
    %497 = vrot.lane.b32.xlu0 %v495, 32
    %v498 = vpop.permute.xlu0 %497
    %v500 = vadd.f32 %v490, %v498
    %v501 = vtanh.pop %v500
    %503 = vrot.lane.b32.xlu0 %v501, 64
    %v504 = vpop.permute.xlu0 %503
    %v506 = vmul.f32 %v488, %v504
    %508 = vrot.lane.b32.xlu0 %v469, 32
    %v509 = vpop.permute.xlu0 %508
    %s511 = scalar_lea.vmem [#allocation4], 2
    %512 = vst.msk [vmem:[%s511] sm:$0x3] %vm372, %v509
    %514 = vrot.lane.b32.xlu0 %v506, 32
    %v515 = vpop.permute.xlu0 %514
    %s517 = scalar_lea.vmem [#allocation5], 12
    %518 = vst.msk [vmem:[%s517] sm:$0x3] %vm372, %v515
    %519 = vrot.lane.b32.xlu0 %v506, 64
    %v520 = vpop.permute.xlu0 %519
    %v522 = vsel %vm134, %v509, %v520
    %v524 = vsel %vm245, %v522, 0
    %526 = vmatpush.msra.mxu0 0.0
    %527 = vmatpush.msra.mxu0 0.0
    %528 = vmatpush.msra.mxu0 0.0
    %529 = vmatpush.msra.mxu0 0.0
    %530 = vmatpush.msra.mxu0 0.0
    %531 = vmatpush.msra.mxu0 0.0
    %532 = vmatpush.msra.mxu0 0.0
    %533 = vmatpush.msra.mxu0 0.0
    %534 = vmatpush.msra.mxu0 %v243
    %535 = vmatpush.msra.mxu0 %v241
    %536 = vmatpush.msra.mxu0 %v239
    %537 = vmatpush.msra.mxu0 %v237
    %538 = vmatpush.msra.mxu0 %v235
    %539 = vmatpush.msra.mxu0 %v233
    %540 = vmatpush.msra.mxu0 %v231
    %541 = vmatpush.msra.mxu0 %v229
    %542 = vmatmul.f32.gmra.mxu0 %v524
    %v543 = vpop.f32.mrf.mxu0
    %v544 = vadd.f32 0.0, %v543
    %545 = vdwg.mxu0
    %546 = vmatpush.msra.mxu0 0.0
    %547 = vmatpush.msra.mxu0 0.0
    %548 = vmatpush.msra.mxu0 0.0
    %549 = vmatpush.msra.mxu0 0.0
    %550 = vmatpush.msra.mxu0 0.0
    %551 = vmatpush.msra.mxu0 0.0
    %552 = vmatpush.msra.mxu0 0.0
    %553 = vmatpush.msra.mxu0 0.0
    %554 = vmatpush.msra.mxu0 %v244
    %555 = vmatpush.msra.mxu0 %v242
    %556 = vmatpush.msra.mxu0 %v240
    %557 = vmatpush.msra.mxu0 %v238
    %558 = vmatpush.msra.mxu0 %v236
    %559 = vmatpush.msra.mxu0 %v234
    %560 = vmatpush.msra.mxu0 %v232
    %561 = vmatpush.msra.mxu0 %v230
    %562 = vmatmul.f32.gmra.mxu0 %v524
    %v563 = vpop.f32.mrf.mxu0
    %v564 = vadd.f32 0.0, %v563
    %565 = vdwg.mxu0
    %s566 = scalar_lea.vmem [#allocation2], 4
    %v567 = vld [vmem:[%s566] sm:$0x3]
    %v568 = vadd.f32 %v544, %v567
    %s569 = scalar_lea.vmem [#allocation3], 10
    %v570 = vld [vmem:[%s569] sm:$0x3]
    %v571 = vadd.f32 %v564, %v570
    %v572 = vxor.u32 %v568, 2147483648
    %v573 = vmul.f32 %v572, 1.442695
    %v574 = vpow.pop %v573
    %v575 = vadd.f32 %v574, 1.0
    %v576 = vrcp.pop %v575
    %v577 = vmul.f32 %v575, %v576
    %v578 = vsub.f32 1.0, %v577
    %v579 = vmul.f32 %v576, %v578
    %v580 = vadd.f32 %v576, %v579
    %vm581 = vweird.f32 %v575
    %vm582 = vweird.f32 %v576
    %vm583 = vmor %vm581, %vm582
    %v584 = vsel %vm583, %v576, %v580
    %v585 = vand.u32 2147483647, %v575
    %vm586 = vcmp.eq.f32.partialorder %v585, 8.507059e+37
    %v587 = vand.u32 %v575, 2147483648
    %v588 = vor.u32 1.1754944e-38, %v587
    %v589 = vsel %vm586, %v588, %v584
    %v590 = vmul.f32 1.0, %v589
    %v591 = vtanh.pop %v568
    %v592 = vmul.f32 %v590, %v463
    %594 = vrot.lane.b32.xlu0 %v591, 64
    %v595 = vpop.permute.xlu0 %594
    %v597 = vmul.f32 %v590, %v595
    %599 = vrot.lane.b32.xlu0 %v597, 32
    %v600 = vpop.permute.xlu0 %599
    %v602 = vadd.f32 %v592, %v600
    %v603 = vtanh.pop %v602
    %605 = vrot.lane.b32.xlu0 %v603, 64
    %v606 = vpop.permute.xlu0 %605
    %v608 = vmul.f32 %v590, %v606
    %v609 = vxor.u32 %v571, 2147483648
    %v610 = vmul.f32 %v609, 1.442695
    %v611 = vpow.pop %v610
    %v612 = vadd.f32 %v611, 1.0
    %v613 = vrcp.pop %v612
    %v614 = vmul.f32 %v612, %v613
    %v615 = vsub.f32 1.0, %v614
    %v616 = vmul.f32 %v613, %v615
    %v617 = vadd.f32 %v613, %v616
    %vm618 = vweird.f32 %v612
    %vm619 = vweird.f32 %v613
    %vm620 = vmor %vm618, %vm619
    %v621 = vsel %vm620, %v613, %v617
    %v622 = vand.u32 2147483647, %v612
    %vm623 = vcmp.eq.f32.partialorder %v622, 8.507059e+37
    %v624 = vand.u32 %v612, 2147483648
    %v625 = vor.u32 1.1754944e-38, %v624
    %v626 = vsel %vm623, %v625, %v621
    %v627 = vmul.f32 1.0, %v626
    %v628 = vtanh.pop %v571
    %v629 = vmul.f32 %v627, %v500
    %631 = vrot.lane.b32.xlu0 %v628, 64
    %v632 = vpop.permute.xlu0 %631
    %v634 = vmul.f32 %v627, %v632
    %636 = vrot.lane.b32.xlu0 %v634, 32
    %v637 = vpop.permute.xlu0 %636
    %v639 = vadd.f32 %v629, %v637
    %v640 = vtanh.pop %v639
    %642 = vrot.lane.b32.xlu0 %v640, 64
    %v643 = vpop.permute.xlu0 %642
    %v645 = vmul.f32 %v627, %v643
    %647 = vrot.lane.b32.xlu0 %v608, 32
    %v648 = vpop.permute.xlu0 %647
    %s650 = scalar_lea.vmem [#allocation4], 4
    %651 = vst.msk [vmem:[%s650] sm:$0x3] %vm372, %v648
    %653 = vrot.lane.b32.xlu0 %v645, 32
    %v654 = vpop.permute.xlu0 %653
    %s656 = scalar_lea.vmem [#allocation5], 10
    %657 = vst.msk [vmem:[%s656] sm:$0x3] %vm372, %v654
    %658 = vrot.lane.b32.xlu0 %v645, 64
    %v659 = vpop.permute.xlu0 %658
    %v661 = vsel %vm134, %v648, %v659
    %v663 = vsel %vm245, %v661, 0
    %665 = vmatpush.msra.mxu0 0.0
    %666 = vmatpush.msra.mxu0 0.0
    %667 = vmatpush.msra.mxu0 0.0
    %668 = vmatpush.msra.mxu0 0.0
    %669 = vmatpush.msra.mxu0 0.0
    %670 = vmatpush.msra.mxu0 0.0
    %671 = vmatpush.msra.mxu0 0.0
    %672 = vmatpush.msra.mxu0 0.0
    %673 = vmatpush.msra.mxu0 %v243
    %674 = vmatpush.msra.mxu0 %v241
    %675 = vmatpush.msra.mxu0 %v239
    %676 = vmatpush.msra.mxu0 %v237
    %677 = vmatpush.msra.mxu0 %v235
    %678 = vmatpush.msra.mxu0 %v233
    %679 = vmatpush.msra.mxu0 %v231
    %680 = vmatpush.msra.mxu0 %v229
    %681 = vmatmul.f32.gmra.mxu0 %v663
    %v682 = vpop.f32.mrf.mxu0
    %v683 = vadd.f32 0.0, %v682
    %684 = vdwg.mxu0
    %685 = vmatpush.msra.mxu0 0.0
    %686 = vmatpush.msra.mxu0 0.0
    %687 = vmatpush.msra.mxu0 0.0
    %688 = vmatpush.msra.mxu0 0.0
    %689 = vmatpush.msra.mxu0 0.0
    %690 = vmatpush.msra.mxu0 0.0
    %691 = vmatpush.msra.mxu0 0.0
    %692 = vmatpush.msra.mxu0 0.0
    %693 = vmatpush.msra.mxu0 %v244
    %694 = vmatpush.msra.mxu0 %v242
    %695 = vmatpush.msra.mxu0 %v240
    %696 = vmatpush.msra.mxu0 %v238
    %697 = vmatpush.msra.mxu0 %v236
    %698 = vmatpush.msra.mxu0 %v234
    %699 = vmatpush.msra.mxu0 %v232
    %700 = vmatpush.msra.mxu0 %v230
    %701 = vmatmul.f32.gmra.mxu0 %v663
    %v702 = vpop.f32.mrf.mxu0
    %v703 = vadd.f32 0.0, %v702
    %704 = vdwg.mxu0
    %s705 = scalar_lea.vmem [#allocation2], 6
    %v706 = vld [vmem:[%s705] sm:$0x3]
    %v707 = vadd.f32 %v683, %v706
    %s708 = scalar_lea.vmem [#allocation3], 8
    %v709 = vld [vmem:[%s708] sm:$0x3]
    %v710 = vadd.f32 %v703, %v709
    %v711 = vxor.u32 %v707, 2147483648
    %v712 = vmul.f32 %v711, 1.442695
    %v713 = vpow.pop %v712
    %v714 = vadd.f32 %v713, 1.0
    %v715 = vrcp.pop %v714
    %v716 = vmul.f32 %v714, %v715
    %v717 = vsub.f32 1.0, %v716
    %v718 = vmul.f32 %v715, %v717
    %v719 = vadd.f32 %v715, %v718
    %vm720 = vweird.f32 %v714
    %vm721 = vweird.f32 %v715
    %vm722 = vmor %vm720, %vm721
    %v723 = vsel %vm722, %v715, %v719
    %v724 = vand.u32 2147483647, %v714
    %vm725 = vcmp.eq.f32.partialorder %v724, 8.507059e+37
    %v726 = vand.u32 %v714, 2147483648
    %v727 = vor.u32 1.1754944e-38, %v726
    %v728 = vsel %vm725, %v727, %v723
    %v729 = vmul.f32 1.0, %v728
    %v730 = vtanh.pop %v707
    %v731 = vmul.f32 %v729, %v602
    %733 = vrot.lane.b32.xlu0 %v730, 64
    %v734 = vpop.permute.xlu0 %733
    %v736 = vmul.f32 %v729, %v734
    %738 = vrot.lane.b32.xlu0 %v736, 32
    %v739 = vpop.permute.xlu0 %738
    %v741 = vadd.f32 %v731, %v739
    %v742 = vtanh.pop %v741
    %744 = vrot.lane.b32.xlu0 %v742, 64
    %v745 = vpop.permute.xlu0 %744
    %v747 = vmul.f32 %v729, %v745
    %v748 = vxor.u32 %v710, 2147483648
    %v749 = vmul.f32 %v748, 1.442695
    %v750 = vpow.pop %v749
    %v751 = vadd.f32 %v750, 1.0
    %v752 = vrcp.pop %v751
    %v753 = vmul.f32 %v751, %v752
    %v754 = vsub.f32 1.0, %v753
    %v755 = vmul.f32 %v752, %v754
    %v756 = vadd.f32 %v752, %v755
    %vm757 = vweird.f32 %v751
    %vm758 = vweird.f32 %v752
    %vm759 = vmor %vm757, %vm758
    %v760 = vsel %vm759, %v752, %v756
    %v761 = vand.u32 2147483647, %v751
    %vm762 = vcmp.eq.f32.partialorder %v761, 8.507059e+37
    %v763 = vand.u32 %v751, 2147483648
    %v764 = vor.u32 1.1754944e-38, %v763
    %v765 = vsel %vm762, %v764, %v760
    %v766 = vmul.f32 1.0, %v765
    %v767 = vtanh.pop %v710
    %v768 = vmul.f32 %v766, %v639
    %770 = vrot.lane.b32.xlu0 %v767, 64
    %v771 = vpop.permute.xlu0 %770
    %v773 = vmul.f32 %v766, %v771
    %775 = vrot.lane.b32.xlu0 %v773, 32
    %v776 = vpop.permute.xlu0 %775
    %v778 = vadd.f32 %v768, %v776
    %v779 = vtanh.pop %v778
    %781 = vrot.lane.b32.xlu0 %v779, 64
    %v782 = vpop.permute.xlu0 %781
    %v784 = vmul.f32 %v766, %v782
    %786 = vrot.lane.b32.xlu0 %v747, 32
    %v787 = vpop.permute.xlu0 %786
    %s789 = scalar_lea.vmem [#allocation4], 6
    %790 = vst.msk [vmem:[%s789] sm:$0x3] %vm372, %v787
    %792 = vrot.lane.b32.xlu0 %v784, 32
    %v793 = vpop.permute.xlu0 %792
    %s795 = scalar_lea.vmem [#allocation5], 8
    %796 = vst.msk [vmem:[%s795] sm:$0x3] %vm372, %v793
    %797 = vrot.lane.b32.xlu0 %v784, 64
    %v798 = vpop.permute.xlu0 %797
    %v800 = vsel %vm134, %v787, %v798
    %v802 = vsel %vm245, %v800, 0
    %804 = vmatpush.msra.mxu0 0.0
    %805 = vmatpush.msra.mxu0 0.0
    %806 = vmatpush.msra.mxu0 0.0
    %807 = vmatpush.msra.mxu0 0.0
    %808 = vmatpush.msra.mxu0 0.0
    %809 = vmatpush.msra.mxu0 0.0
    %810 = vmatpush.msra.mxu0 0.0
    %811 = vmatpush.msra.mxu0 0.0
    %812 = vmatpush.msra.mxu0 %v243
    %813 = vmatpush.msra.mxu0 %v241
    %814 = vmatpush.msra.mxu0 %v239
    %815 = vmatpush.msra.mxu0 %v237
    %816 = vmatpush.msra.mxu0 %v235
    %817 = vmatpush.msra.mxu0 %v233
    %818 = vmatpush.msra.mxu0 %v231
    %819 = vmatpush.msra.mxu0 %v229
    %820 = vmatmul.f32.gmra.mxu0 %v802
    %v821 = vpop.f32.mrf.mxu0
    %v822 = vadd.f32 0.0, %v821
    %823 = vdwg.mxu0
    %824 = vmatpush.msra.mxu0 0.0
    %825 = vmatpush.msra.mxu0 0.0
    %826 = vmatpush.msra.mxu0 0.0
    %827 = vmatpush.msra.mxu0 0.0
    %828 = vmatpush.msra.mxu0 0.0
    %829 = vmatpush.msra.mxu0 0.0
    %830 = vmatpush.msra.mxu0 0.0
    %831 = vmatpush.msra.mxu0 0.0
    %832 = vmatpush.msra.mxu0 %v244
    %833 = vmatpush.msra.mxu0 %v242
    %834 = vmatpush.msra.mxu0 %v240
    %835 = vmatpush.msra.mxu0 %v238
    %836 = vmatpush.msra.mxu0 %v236
    %837 = vmatpush.msra.mxu0 %v234
    %838 = vmatpush.msra.mxu0 %v232
    %839 = vmatpush.msra.mxu0 %v230
    %840 = vmatmul.f32.gmra.mxu0 %v802
    %v841 = vpop.f32.mrf.mxu0
    %v842 = vadd.f32 0.0, %v841
    %843 = vdwg.mxu0
    %s844 = scalar_lea.vmem [#allocation2], 8
    %v845 = vld [vmem:[%s844] sm:$0x3]
    %v846 = vadd.f32 %v822, %v845
    %s847 = scalar_lea.vmem [#allocation3], 6
    %v848 = vld [vmem:[%s847] sm:$0x3]
    %v849 = vadd.f32 %v842, %v848
    %v850 = vxor.u32 %v846, 2147483648
    %v851 = vmul.f32 %v850, 1.442695
    %v852 = vpow.pop %v851
    %v853 = vadd.f32 %v852, 1.0
    %v854 = vrcp.pop %v853
    %v855 = vmul.f32 %v853, %v854
    %v856 = vsub.f32 1.0, %v855
    %v857 = vmul.f32 %v854, %v856
    %v858 = vadd.f32 %v854, %v857
    %vm859 = vweird.f32 %v853
    %vm860 = vweird.f32 %v854
    %vm861 = vmor %vm859, %vm860
    %v862 = vsel %vm861, %v854, %v858
    %v863 = vand.u32 2147483647, %v853
    %vm864 = vcmp.eq.f32.partialorder %v863, 8.507059e+37
    %v865 = vand.u32 %v853, 2147483648
    %v866 = vor.u32 1.1754944e-38, %v865
    %v867 = vsel %vm864, %v866, %v862
    %v868 = vmul.f32 1.0, %v867
    %v869 = vtanh.pop %v846
    %v870 = vmul.f32 %v868, %v741
    %872 = vrot.lane.b32.xlu0 %v869, 64
    %v873 = vpop.permute.xlu0 %872
    %v875 = vmul.f32 %v868, %v873
    %877 = vrot.lane.b32.xlu0 %v875, 32
    %v878 = vpop.permute.xlu0 %877
    %v880 = vadd.f32 %v870, %v878
    %v881 = vtanh.pop %v880
    %883 = vrot.lane.b32.xlu0 %v881, 64
    %v884 = vpop.permute.xlu0 %883
    %v886 = vmul.f32 %v868, %v884
    %v887 = vxor.u32 %v849, 2147483648
    %v888 = vmul.f32 %v887, 1.442695
    %v889 = vpow.pop %v888
    %v890 = vadd.f32 %v889, 1.0
    %v891 = vrcp.pop %v890
    %v892 = vmul.f32 %v890, %v891
    %v893 = vsub.f32 1.0, %v892
    %v894 = vmul.f32 %v891, %v893
    %v895 = vadd.f32 %v891, %v894
    %vm896 = vweird.f32 %v890
    %vm897 = vweird.f32 %v891
    %vm898 = vmor %vm896, %vm897
    %v899 = vsel %vm898, %v891, %v895
    %v900 = vand.u32 2147483647, %v890
    %vm901 = vcmp.eq.f32.partialorder %v900, 8.507059e+37
    %v902 = vand.u32 %v890, 2147483648
    %v903 = vor.u32 1.1754944e-38, %v902
    %v904 = vsel %vm901, %v903, %v899
    %v905 = vmul.f32 1.0, %v904
    %v906 = vtanh.pop %v849
    %v907 = vmul.f32 %v905, %v778
    %909 = vrot.lane.b32.xlu0 %v906, 64
    %v910 = vpop.permute.xlu0 %909
    %v912 = vmul.f32 %v905, %v910
    %914 = vrot.lane.b32.xlu0 %v912, 32
    %v915 = vpop.permute.xlu0 %914
    %v917 = vadd.f32 %v907, %v915
    %v918 = vtanh.pop %v917
    %920 = vrot.lane.b32.xlu0 %v918, 64
    %v921 = vpop.permute.xlu0 %920
    %v923 = vmul.f32 %v905, %v921
    %925 = vrot.lane.b32.xlu0 %v886, 32
    %v926 = vpop.permute.xlu0 %925
    %s928 = scalar_lea.vmem [#allocation4], 8
    %929 = vst.msk [vmem:[%s928] sm:$0x3] %vm372, %v926
    %931 = vrot.lane.b32.xlu0 %v923, 32
    %v932 = vpop.permute.xlu0 %931
    %s934 = scalar_lea.vmem [#allocation5], 6
    %935 = vst.msk [vmem:[%s934] sm:$0x3] %vm372, %v932
    %936 = vrot.lane.b32.xlu0 %v923, 64
    %v937 = vpop.permute.xlu0 %936
    %v939 = vsel %vm134, %v926, %v937
    %v941 = vsel %vm245, %v939, 0
    %943 = vmatpush.msra.mxu0 0.0
    %944 = vmatpush.msra.mxu0 0.0
    %945 = vmatpush.msra.mxu0 0.0
    %946 = vmatpush.msra.mxu0 0.0
    %947 = vmatpush.msra.mxu0 0.0
    %948 = vmatpush.msra.mxu0 0.0
    %949 = vmatpush.msra.mxu0 0.0
    %950 = vmatpush.msra.mxu0 0.0
    %951 = vmatpush.msra.mxu0 %v243
    %952 = vmatpush.msra.mxu0 %v241
    %953 = vmatpush.msra.mxu0 %v239
    %954 = vmatpush.msra.mxu0 %v237
    %955 = vmatpush.msra.mxu0 %v235
    %956 = vmatpush.msra.mxu0 %v233
    %957 = vmatpush.msra.mxu0 %v231
    %958 = vmatpush.msra.mxu0 %v229
    %959 = vmatmul.f32.gmra.mxu0 %v941
    %v960 = vpop.f32.mrf.mxu0
    %v961 = vadd.f32 0.0, %v960
    %962 = vdwg.mxu0
    %963 = vmatpush.msra.mxu0 0.0
    %964 = vmatpush.msra.mxu0 0.0
    %965 = vmatpush.msra.mxu0 0.0
    %966 = vmatpush.msra.mxu0 0.0
    %967 = vmatpush.msra.mxu0 0.0
    %968 = vmatpush.msra.mxu0 0.0
    %969 = vmatpush.msra.mxu0 0.0
    %970 = vmatpush.msra.mxu0 0.0
    %971 = vmatpush.msra.mxu0 %v244
    %972 = vmatpush.msra.mxu0 %v242
    %973 = vmatpush.msra.mxu0 %v240
    %974 = vmatpush.msra.mxu0 %v238
    %975 = vmatpush.msra.mxu0 %v236
    %976 = vmatpush.msra.mxu0 %v234
    %977 = vmatpush.msra.mxu0 %v232
    %978 = vmatpush.msra.mxu0 %v230
    %979 = vmatmul.f32.gmra.mxu0 %v941
    %v980 = vpop.f32.mrf.mxu0
    %v981 = vadd.f32 0.0, %v980
    %982 = vdwg.mxu0
    %s983 = scalar_lea.vmem [#allocation2], 10
    %v984 = vld [vmem:[%s983] sm:$0x3]
    %v985 = vadd.f32 %v961, %v984
    %s986 = scalar_lea.vmem [#allocation3], 4
    %v987 = vld [vmem:[%s986] sm:$0x3]
    %v988 = vadd.f32 %v981, %v987
    %v989 = vxor.u32 %v985, 2147483648
    %v990 = vmul.f32 %v989, 1.442695
    %v991 = vpow.pop %v990
    %v992 = vadd.f32 %v991, 1.0
    %v993 = vrcp.pop %v992
    %v994 = vmul.f32 %v992, %v993
    %v995 = vsub.f32 1.0, %v994
    %v996 = vmul.f32 %v993, %v995
    %v997 = vadd.f32 %v993, %v996
    %vm998 = vweird.f32 %v992
    %vm999 = vweird.f32 %v993
    %vm1000 = vmor %vm998, %vm999
    %v1001 = vsel %vm1000, %v993, %v997
    %v1002 = vand.u32 2147483647, %v992
    %vm1003 = vcmp.eq.f32.partialorder %v1002, 8.507059e+37
    %v1004 = vand.u32 %v992, 2147483648
    %v1005 = vor.u32 1.1754944e-38, %v1004
    %v1006 = vsel %vm1003, %v1005, %v1001
    %v1007 = vmul.f32 1.0, %v1006
    %v1008 = vtanh.pop %v985
    %v1009 = vmul.f32 %v1007, %v880
    %1011 = vrot.lane.b32.xlu0 %v1008, 64
    %v1012 = vpop.permute.xlu0 %1011
    %v1014 = vmul.f32 %v1007, %v1012
    %1016 = vrot.lane.b32.xlu0 %v1014, 32
    %v1017 = vpop.permute.xlu0 %1016
    %v1019 = vadd.f32 %v1009, %v1017
    %v1020 = vtanh.pop %v1019
    %1022 = vrot.lane.b32.xlu0 %v1020, 64
    %v1023 = vpop.permute.xlu0 %1022
    %v1025 = vmul.f32 %v1007, %v1023
    %v1026 = vxor.u32 %v988, 2147483648
    %v1027 = vmul.f32 %v1026, 1.442695
    %v1028 = vpow.pop %v1027
    %v1029 = vadd.f32 %v1028, 1.0
    %v1030 = vrcp.pop %v1029
    %v1031 = vmul.f32 %v1029, %v1030
    %v1032 = vsub.f32 1.0, %v1031
    %v1033 = vmul.f32 %v1030, %v1032
    %v1034 = vadd.f32 %v1030, %v1033
    %vm1035 = vweird.f32 %v1029
    %vm1036 = vweird.f32 %v1030
    %vm1037 = vmor %vm1035, %vm1036
    %v1038 = vsel %vm1037, %v1030, %v1034
    %v1039 = vand.u32 2147483647, %v1029
    %vm1040 = vcmp.eq.f32.partialorder %v1039, 8.507059e+37
    %v1041 = vand.u32 %v1029, 2147483648
    %v1042 = vor.u32 1.1754944e-38, %v1041
    %v1043 = vsel %vm1040, %v1042, %v1038
    %v1044 = vmul.f32 1.0, %v1043
    %v1045 = vtanh.pop %v988
    %v1046 = vmul.f32 %v1044, %v917
    %1048 = vrot.lane.b32.xlu0 %v1045, 64
    %v1049 = vpop.permute.xlu0 %1048
    %v1051 = vmul.f32 %v1044, %v1049
    %1053 = vrot.lane.b32.xlu0 %v1051, 32
    %v1054 = vpop.permute.xlu0 %1053
    %v1056 = vadd.f32 %v1046, %v1054
    %v1057 = vtanh.pop %v1056
    %1059 = vrot.lane.b32.xlu0 %v1057, 64
    %v1060 = vpop.permute.xlu0 %1059
    %v1062 = vmul.f32 %v1044, %v1060
    %1064 = vrot.lane.b32.xlu0 %v1025, 32
    %v1065 = vpop.permute.xlu0 %1064
    %s1067 = scalar_lea.vmem [#allocation4], 10
    %1068 = vst.msk [vmem:[%s1067] sm:$0x3] %vm372, %v1065
    %1070 = vrot.lane.b32.xlu0 %v1062, 32
    %v1071 = vpop.permute.xlu0 %1070
    %s1073 = scalar_lea.vmem [#allocation5], 4
    %1074 = vst.msk [vmem:[%s1073] sm:$0x3] %vm372, %v1071
    %1075 = vrot.lane.b32.xlu0 %v1062, 64
    %v1076 = vpop.permute.xlu0 %1075
    %v1078 = vsel %vm134, %v1065, %v1076
    %v1080 = vsel %vm245, %v1078, 0
    %1082 = vmatpush.msra.mxu0 0.0
    %1083 = vmatpush.msra.mxu0 0.0
    %1084 = vmatpush.msra.mxu0 0.0
    %1085 = vmatpush.msra.mxu0 0.0
    %1086 = vmatpush.msra.mxu0 0.0
    %1087 = vmatpush.msra.mxu0 0.0
    %1088 = vmatpush.msra.mxu0 0.0
    %1089 = vmatpush.msra.mxu0 0.0
    %1090 = vmatpush.msra.mxu0 %v243
    %1091 = vmatpush.msra.mxu0 %v241
    %1092 = vmatpush.msra.mxu0 %v239
    %1093 = vmatpush.msra.mxu0 %v237
    %1094 = vmatpush.msra.mxu0 %v235
    %1095 = vmatpush.msra.mxu0 %v233
    %1096 = vmatpush.msra.mxu0 %v231
    %1097 = vmatpush.msra.mxu0 %v229
    %1098 = vmatmul.f32.gmra.mxu0 %v1080
    %v1099 = vpop.f32.mrf.mxu0
    %v1100 = vadd.f32 0.0, %v1099
    %1101 = vdwg.mxu0
    %1102 = vmatpush.msra.mxu0 0.0
    %1103 = vmatpush.msra.mxu0 0.0
    %1104 = vmatpush.msra.mxu0 0.0
    %1105 = vmatpush.msra.mxu0 0.0
    %1106 = vmatpush.msra.mxu0 0.0
    %1107 = vmatpush.msra.mxu0 0.0
    %1108 = vmatpush.msra.mxu0 0.0
    %1109 = vmatpush.msra.mxu0 0.0
    %1110 = vmatpush.msra.mxu0 %v244
    %1111 = vmatpush.msra.mxu0 %v242
    %1112 = vmatpush.msra.mxu0 %v240
    %1113 = vmatpush.msra.mxu0 %v238
    %1114 = vmatpush.msra.mxu0 %v236
    %1115 = vmatpush.msra.mxu0 %v234
    %1116 = vmatpush.msra.mxu0 %v232
    %1117 = vmatpush.msra.mxu0 %v230
    %1118 = vmatmul.f32.gmra.mxu0 %v1080
    %v1119 = vpop.f32.mrf.mxu0
    %v1120 = vadd.f32 0.0, %v1119
    %1121 = vdwg.mxu0
    %s1122 = scalar_lea.vmem [#allocation2], 12
    %v1123 = vld [vmem:[%s1122] sm:$0x3]
    %v1124 = vadd.f32 %v1100, %v1123
    %s1125 = scalar_lea.vmem [#allocation3], 2
    %v1126 = vld [vmem:[%s1125] sm:$0x3]
    %v1127 = vadd.f32 %v1120, %v1126
    %v1128 = vxor.u32 %v1124, 2147483648
    %v1129 = vmul.f32 %v1128, 1.442695
    %v1130 = vpow.pop %v1129
    %v1131 = vadd.f32 %v1130, 1.0
    %v1132 = vrcp.pop %v1131
    %v1133 = vmul.f32 %v1131, %v1132
    %v1134 = vsub.f32 1.0, %v1133
    %v1135 = vmul.f32 %v1132, %v1134
    %v1136 = vadd.f32 %v1132, %v1135
    %vm1137 = vweird.f32 %v1131
    %vm1138 = vweird.f32 %v1132
    %vm1139 = vmor %vm1137, %vm1138
    %v1140 = vsel %vm1139, %v1132, %v1136
    %v1141 = vand.u32 2147483647, %v1131
    %vm1142 = vcmp.eq.f32.partialorder %v1141, 8.507059e+37
    %v1143 = vand.u32 %v1131, 2147483648
    %v1144 = vor.u32 1.1754944e-38, %v1143
    %v1145 = vsel %vm1142, %v1144, %v1140
    %v1146 = vmul.f32 1.0, %v1145
    %v1147 = vtanh.pop %v1124
    %v1148 = vmul.f32 %v1146, %v1019
    %1150 = vrot.lane.b32.xlu0 %v1147, 64
    %v1151 = vpop.permute.xlu0 %1150
    %v1153 = vmul.f32 %v1146, %v1151
    %1155 = vrot.lane.b32.xlu0 %v1153, 32
    %v1156 = vpop.permute.xlu0 %1155
    %v1158 = vadd.f32 %v1148, %v1156
    %v1159 = vtanh.pop %v1158
    %1161 = vrot.lane.b32.xlu0 %v1159, 64
    %v1162 = vpop.permute.xlu0 %1161
    %v1164 = vmul.f32 %v1146, %v1162
    %v1165 = vxor.u32 %v1127, 2147483648
    %v1166 = vmul.f32 %v1165, 1.442695
    %v1167 = vpow.pop %v1166
    %v1168 = vadd.f32 %v1167, 1.0
    %v1169 = vrcp.pop %v1168
    %v1170 = vmul.f32 %v1168, %v1169
    %v1171 = vsub.f32 1.0, %v1170
    %v1172 = vmul.f32 %v1169, %v1171
    %v1173 = vadd.f32 %v1169, %v1172
    %vm1174 = vweird.f32 %v1168
    %vm1175 = vweird.f32 %v1169
    %vm1176 = vmor %vm1174, %vm1175
    %v1177 = vsel %vm1176, %v1169, %v1173
    %v1178 = vand.u32 2147483647, %v1168
    %vm1179 = vcmp.eq.f32.partialorder %v1178, 8.507059e+37
    %v1180 = vand.u32 %v1168, 2147483648
    %v1181 = vor.u32 1.1754944e-38, %v1180
    %v1182 = vsel %vm1179, %v1181, %v1177
    %v1183 = vmul.f32 1.0, %v1182
    %v1184 = vtanh.pop %v1127
    %v1185 = vmul.f32 %v1183, %v1056
    %1187 = vrot.lane.b32.xlu0 %v1184, 64
    %v1188 = vpop.permute.xlu0 %1187
    %v1190 = vmul.f32 %v1183, %v1188
    %1192 = vrot.lane.b32.xlu0 %v1190, 32
    %v1193 = vpop.permute.xlu0 %1192
    %v1195 = vadd.f32 %v1185, %v1193
    %v1196 = vtanh.pop %v1195
    %1198 = vrot.lane.b32.xlu0 %v1196, 64
    %v1199 = vpop.permute.xlu0 %1198
    %v1201 = vmul.f32 %v1183, %v1199
    %1203 = vrot.lane.b32.xlu0 %v1164, 32
    %v1204 = vpop.permute.xlu0 %1203
    %s1206 = scalar_lea.vmem [#allocation4], 12
    %1207 = vst.msk [vmem:[%s1206] sm:$0x3] %vm372, %v1204
    %1209 = vrot.lane.b32.xlu0 %v1201, 32
    %v1210 = vpop.permute.xlu0 %1209
    %s1212 = scalar_lea.vmem [#allocation5], 2
    %1213 = vst.msk [vmem:[%s1212] sm:$0x3] %vm372, %v1210
    %1214 = vrot.lane.b32.xlu0 %v1201, 64
    %v1215 = vpop.permute.xlu0 %1214
    %v1217 = vsel %vm134, %v1204, %v1215
    %v1219 = vsel %vm245, %v1217, 0
    %1221 = vmatpush.msra.mxu0 0.0
    %1222 = vmatpush.msra.mxu0 0.0
    %1223 = vmatpush.msra.mxu0 0.0
    %1224 = vmatpush.msra.mxu0 0.0
    %1225 = vmatpush.msra.mxu0 0.0
    %1226 = vmatpush.msra.mxu0 0.0
    %1227 = vmatpush.msra.mxu0 0.0
    %1228 = vmatpush.msra.mxu0 0.0
    %1229 = vmatpush.msra.mxu0 %v243
    %1230 = vmatpush.msra.mxu0 %v241
    %1231 = vmatpush.msra.mxu0 %v239
    %1232 = vmatpush.msra.mxu0 %v237
    %1233 = vmatpush.msra.mxu0 %v235
    %1234 = vmatpush.msra.mxu0 %v233
    %1235 = vmatpush.msra.mxu0 %v231
    %1236 = vmatpush.msra.mxu0 %v229
    %1237 = vmatmul.f32.gmra.mxu0 %v1219
    %v1238 = vpop.f32.mrf.mxu0
    %v1239 = vadd.f32 0.0, %v1238
    %1240 = vdwg.mxu0
    %1241 = vmatpush.msra.mxu0 0.0
    %1242 = vmatpush.msra.mxu0 0.0
    %1243 = vmatpush.msra.mxu0 0.0
    %1244 = vmatpush.msra.mxu0 0.0
    %1245 = vmatpush.msra.mxu0 0.0
    %1246 = vmatpush.msra.mxu0 0.0
    %1247 = vmatpush.msra.mxu0 0.0
    %1248 = vmatpush.msra.mxu0 0.0
    %1249 = vmatpush.msra.mxu0 %v244
    %1250 = vmatpush.msra.mxu0 %v242
    %1251 = vmatpush.msra.mxu0 %v240
    %1252 = vmatpush.msra.mxu0 %v238
    %1253 = vmatpush.msra.mxu0 %v236
    %1254 = vmatpush.msra.mxu0 %v234
    %1255 = vmatpush.msra.mxu0 %v232
    %1256 = vmatpush.msra.mxu0 %v230
    %1257 = vmatmul.f32.gmra.mxu0 %v1219
    %v1258 = vpop.f32.mrf.mxu0
    %v1259 = vadd.f32 0.0, %v1258
    %1260 = vdwg.mxu0
    %s1261 = scalar_lea.vmem [#allocation2], 14
    %v1262 = vld [vmem:[%s1261] sm:$0x3]
    %v1263 = vadd.f32 %v1239, %v1262
    %v1264 = vld [vmem:[#allocation3] sm:$0x3]
    %v1265 = vadd.f32 %v1259, %v1264
    %v1266 = vxor.u32 %v1263, 2147483648
    %v1267 = vmul.f32 %v1266, 1.442695
    %v1268 = vpow.pop %v1267
    %v1269 = vadd.f32 %v1268, 1.0
    %v1270 = vrcp.pop %v1269
    %v1271 = vmul.f32 %v1269, %v1270
    %v1272 = vsub.f32 1.0, %v1271
    %v1273 = vmul.f32 %v1270, %v1272
    %v1274 = vadd.f32 %v1270, %v1273
    %vm1275 = vweird.f32 %v1269
    %vm1276 = vweird.f32 %v1270
    %vm1277 = vmor %vm1275, %vm1276
    %v1278 = vsel %vm1277, %v1270, %v1274
    %v1279 = vand.u32 2147483647, %v1269
    %vm1280 = vcmp.eq.f32.partialorder %v1279, 8.507059e+37
    %v1281 = vand.u32 %v1269, 2147483648
    %v1282 = vor.u32 1.1754944e-38, %v1281
    %v1283 = vsel %vm1280, %v1282, %v1278
    %v1284 = vmul.f32 1.0, %v1283
    %v1285 = vtanh.pop %v1263
    %v1286 = vmul.f32 %v1284, %v1158
    %1288 = vrot.lane.b32.xlu0 %v1285, 64
    %v1289 = vpop.permute.xlu0 %1288
    %v1291 = vmul.f32 %v1284, %v1289
    %1293 = vrot.lane.b32.xlu0 %v1291, 32
    %v1294 = vpop.permute.xlu0 %1293
    %v1296 = vadd.f32 %v1286, %v1294
    %v1297 = vtanh.pop %v1296
    %1299 = vrot.lane.b32.xlu0 %v1297, 64
    %v1300 = vpop.permute.xlu0 %1299
    %v1302 = vmul.f32 %v1284, %v1300
    %v1303 = vxor.u32 %v1265, 2147483648
    %v1304 = vmul.f32 %v1303, 1.442695
    %v1305 = vpow.pop %v1304
    %v1306 = vadd.f32 %v1305, 1.0
    %v1307 = vrcp.pop %v1306
    %v1308 = vmul.f32 %v1306, %v1307
    %v1309 = vsub.f32 1.0, %v1308
    %v1310 = vmul.f32 %v1307, %v1309
    %v1311 = vadd.f32 %v1307, %v1310
    %vm1312 = vweird.f32 %v1306
    %vm1313 = vweird.f32 %v1307
    %vm1314 = vmor %vm1312, %vm1313
    %v1315 = vsel %vm1314, %v1307, %v1311
    %v1316 = vand.u32 2147483647, %v1306
    %vm1317 = vcmp.eq.f32.partialorder %v1316, 8.507059e+37
    %v1318 = vand.u32 %v1306, 2147483648
    %v1319 = vor.u32 1.1754944e-38, %v1318
    %v1320 = vsel %vm1317, %v1319, %v1315
    %v1321 = vmul.f32 1.0, %v1320
    %v1322 = vtanh.pop %v1265
    %v1323 = vmul.f32 %v1321, %v1195
    %1325 = vrot.lane.b32.xlu0 %v1322, 64
    %v1326 = vpop.permute.xlu0 %1325
    %v1328 = vmul.f32 %v1321, %v1326
    %1330 = vrot.lane.b32.xlu0 %v1328, 32
    %v1331 = vpop.permute.xlu0 %1330
    %v1333 = vadd.f32 %v1323, %v1331
    %v1334 = vtanh.pop %v1333
    %1336 = vrot.lane.b32.xlu0 %v1334, 64
    %v1337 = vpop.permute.xlu0 %1336
    %v1339 = vmul.f32 %v1321, %v1337
    %1341 = vrot.lane.b32.xlu0 %v1302, 32
    %v1342 = vpop.permute.xlu0 %1341
    %s1344 = scalar_lea.vmem [#allocation4], 14
    %1345 = vst.msk [vmem:[%s1344] sm:$0x3] %vm372, %v1342
    %1347 = vrot.lane.b32.xlu0 %v1339, 32
    %v1348 = vpop.permute.xlu0 %1347
    %1350 = vst.msk [vmem:[#allocation5] sm:$0x3] %vm372, %v1348
    %v1351 = vld [vmem:[#allocation12] sm:$0xff]
    %v1352 = vld [vmem:[#allocation12 + $0x8] sm:$0xff]
    %v1353 = vld [vmem:[#allocation12 + $0x10] sm:$0xff]
    %v1354 = vld [vmem:[#allocation12 + $0x18] sm:$0xff]
    %v1355 = vld [vmem:[#allocation12 + $0x20] sm:$0xff]
    %v1356 = vld [vmem:[#allocation12 + $0x28] sm:$0xff]
    %v1357 = vld [vmem:[#allocation12 + $0x30] sm:$0xff]
    %v1358 = vld [vmem:[#allocation12 + $0x38] sm:$0xff]
    %v1359 = vld [vmem:[#allocation4] sm:$0x3]
    %v1360 = vld [vmem:[#allocation4 + $0x2] sm:$0x3]
    %v1361 = vld [vmem:[#allocation4 + $0x4] sm:$0x3]
    %v1362 = vld [vmem:[#allocation4 + $0x6] sm:$0x3]
    %v1363 = vld [vmem:[#allocation4 + $0x8] sm:$0x3]
    %v1364 = vld [vmem:[#allocation4 + $0xa] sm:$0x3]
    %v1365 = vld [vmem:[#allocation4 + $0xc] sm:$0x3]
    %v1366 = vld [vmem:[#allocation4 + $0xe] sm:$0x3]
    %v1367 = vld [vmem:[#allocation5] sm:$0x3]
    %v1368 = vld [vmem:[#allocation5 + $0x2] sm:$0x3]
    %v1369 = vld [vmem:[#allocation5 + $0x4] sm:$0x3]
    %v1370 = vld [vmem:[#allocation5 + $0x6] sm:$0x3]
    %v1371 = vld [vmem:[#allocation5 + $0x8] sm:$0x3]
    %v1372 = vld [vmem:[#allocation5 + $0xa] sm:$0x3]
    %v1373 = vld [vmem:[#allocation5 + $0xc] sm:$0x3]
    %v1374 = vld [vmem:[#allocation5 + $0xe] sm:$0x3]
    %1383 = vst [vmem:[#allocation1] ss:$4 sm:$0xff] %v1367
    %s1384 = scalar_lea.vmem [#allocation1], 1
    %1385 = vst [vmem:[%s1384] ss:$4 sm:$0xff] %v1368
    %s1386 = scalar_lea.vmem [#allocation1], 2
    %1387 = vst [vmem:[%s1386] ss:$4 sm:$0xff] %v1369
    %s1388 = scalar_lea.vmem [#allocation1], 3
    %1389 = vst [vmem:[%s1388] ss:$4 sm:$0xff] %v1370
    %s1390 = scalar_lea.vmem [#allocation1], 32
    %1391 = vst [vmem:[%s1390] ss:$4 sm:$0xff] %v1371
    %s1392 = scalar_lea.vmem [#allocation1], 33
    %1393 = vst [vmem:[%s1392] ss:$4 sm:$0xff] %v1372
    %s1394 = scalar_lea.vmem [#allocation1], 34
    %1395 = vst [vmem:[%s1394] ss:$4 sm:$0xff] %v1373
    %s1396 = scalar_lea.vmem [#allocation1], 35
    %1397 = vst [vmem:[%s1396] ss:$4 sm:$0xff] %v1374
    %v1398 = vld.sshfl [vmem:[#allocation1] sm:$0xff pattern:$0x73625140]
    %v1399 = vld.sshfl [vmem:[#allocation1 + $0x20] sm:$0xff pattern:$0x73625140]
    %v1400 = vsel %vm134, %v1398, 0
    %v1402 = vsel %vm134, %v1399, 0
    %1404 = vmatpush.msra.mxu0 0.0
    %1405 = vmatpush.msra.mxu0 0.0
    %1406 = vmatpush.msra.mxu0 0.0
    %1407 = vmatpush.msra.mxu0 0.0
    %1408 = vmatpush.msra.mxu0 0.0
    %1409 = vmatpush.msra.mxu0 0.0
    %1410 = vmatpush.msra.mxu0 0.0
    %1411 = vmatpush.msra.mxu0 0.0
    %1412 = vmatpush.msra.mxu0 0.0
    %1413 = vmatpush.msra.mxu0 0.0
    %1414 = vmatpush.msra.mxu0 0.0
    %1415 = vmatpush.msra.mxu0 0.0
    %1416 = vmatpush.msra.mxu0 %v1358
    %1417 = vmatpush.msra.mxu0 %v1357
    %1418 = vmatpush.msra.mxu0 %v1356
    %1419 = vmatpush.msra.mxu0 %v1355
    %1420 = vmatmul.f32.gmra.mxu0 %v1400
    %v1421 = vpop.f32.mrf.mxu0
    %v1422 = vadd.f32 0.0, %v1421
    %1423 = vmatmul.f32.gmra.mxu0 %v1402
    %v1424 = vpop.f32.mrf.mxu0
    %v1425 = vadd.f32 0.0, %v1424
    %1426 = vdwg.mxu0
    %1435 = vst [vmem:[#allocation1] ss:$4 sm:$0xff] %v1359
    %s1436 = scalar_lea.vmem [#allocation1], 1
    %1437 = vst [vmem:[%s1436] ss:$4 sm:$0xff] %v1360
    %s1438 = scalar_lea.vmem [#allocation1], 2
    %1439 = vst [vmem:[%s1438] ss:$4 sm:$0xff] %v1361
    %s1440 = scalar_lea.vmem [#allocation1], 3
    %1441 = vst [vmem:[%s1440] ss:$4 sm:$0xff] %v1362
    %s1442 = scalar_lea.vmem [#allocation1], 32
    %1443 = vst [vmem:[%s1442] ss:$4 sm:$0xff] %v1363
    %s1444 = scalar_lea.vmem [#allocation1], 33
    %1445 = vst [vmem:[%s1444] ss:$4 sm:$0xff] %v1364
    %s1446 = scalar_lea.vmem [#allocation1], 34
    %1447 = vst [vmem:[%s1446] ss:$4 sm:$0xff] %v1365
    %s1448 = scalar_lea.vmem [#allocation1], 35
    %1449 = vst [vmem:[%s1448] ss:$4 sm:$0xff] %v1366
    %v1450 = vld.sshfl [vmem:[#allocation1] sm:$0xff pattern:$0x73625140]
    %v1451 = vld.sshfl [vmem:[#allocation1 + $0x20] sm:$0xff pattern:$0x73625140]
    %v1452 = vsel %vm134, %v1450, 0
    %v1454 = vsel %vm134, %v1451, 0
    %1456 = vmatpush.msra.mxu0 0.0
    %1457 = vmatpush.msra.mxu0 0.0
    %1458 = vmatpush.msra.mxu0 0.0
    %1459 = vmatpush.msra.mxu0 0.0
    %1460 = vmatpush.msra.mxu0 0.0
    %1461 = vmatpush.msra.mxu0 0.0
    %1462 = vmatpush.msra.mxu0 0.0
    %1463 = vmatpush.msra.mxu0 0.0
    %1464 = vmatpush.msra.mxu0 0.0
    %1465 = vmatpush.msra.mxu0 0.0
    %1466 = vmatpush.msra.mxu0 0.0
    %1467 = vmatpush.msra.mxu0 0.0
    %1468 = vmatpush.msra.mxu0 %v1354
    %1469 = vmatpush.msra.mxu0 %v1353
    %1470 = vmatpush.msra.mxu0 %v1352
    %1471 = vmatpush.msra.mxu0 %v1351
    %1472 = vmatmul.f32.gmra.mxu0 %v1452
    %v1473 = vpop.f32.mrf.mxu0
    %v1474 = vadd.f32 %v1422, %v1473
    %1475 = vmatmul.f32.gmra.mxu0 %v1454
    %v1476 = vpop.f32.mrf.mxu0
    %v1477 = vadd.f32 %v1425, %v1476
    %1478 = vdwg.mxu0
    %v1479 = vld [vmem:[%s5] sm:$0x1]
    %v1481 = vperm.slane %v1479, 0
    %v1483 = vadd.f32 %v1474, %v1481
    %v1484 = vadd.f32 %v1477, %v1481
    %v1487 = vrot.slane %v1483, 2
    %v1488 = vrot.slane %v1483, 4
    %v1489 = vrot.slane %v1483, 6
    %v1490 = vrot.slane %v1484, 2
    %v1491 = vrot.slane %v1484, 4
    %v1492 = vrot.slane %v1484, 6
    %1499 = vst [vmem:[#allocation14] sm:$0x3] %v1483
    %1500 = vst [vmem:[#allocation14 + $0x2] sm:$0x3] %v1487
    %1501 = vst [vmem:[#allocation14 + $0x4] sm:$0x3] %v1488
    %1502 = vst [vmem:[#allocation14 + $0x6] sm:$0x3] %v1489
    %1503 = vst [vmem:[#allocation14 + $0x8] sm:$0x3] %v1484
    %1504 = vst [vmem:[#allocation14 + $0xa] sm:$0x3] %v1490
    %1505 = vst [vmem:[#allocation14 + $0xc] sm:$0x3] %v1491
    %1506 = vst [vmem:[#allocation14 + $0xe] sm:$0x3] %v1492
    // Predicated region
    $region42: #{tpu_custom_call.1} parent=1 // pred_check
      _
    $region43: #{tpu_custom_call.1} parent=1 // pred_check_branch
      %1508 = sbr.rel (0) target = $region45
    $region44: #{tpu_custom_call.1} parent=1 // pred_region
      %1510 = vsyncadd [#allocation8], 0
      %s1511 = sshll.u32 [#allocation14], 4
      %s1512 = int_to_ptr.vmem [resolvable:$true] %s1511
      %s1513 = sshll.u32 %s6, 4
      %s1514 = int_to_ptr.hbm [resolvable:$true] %s1513
      %1519 = dma.vmem_to_hbm [thread:$0]  %s1512, 256, %s1514, [#allocation8], 32, 32, 2
    $region45: #{tpu_custom_call.1} parent=1 // pred_fallthru
      _
    // Predicated region
    $region46: #{tpu_custom_call.1} parent=1 // pred_check
      _
    $region47: #{tpu_custom_call.1} parent=1 // pred_check_branch
      %1521 = sbr.rel (0) target = $region49
    $region48: #{tpu_custom_call.1} parent=1 // pred_region
      %1523 = dma.done [#allocation8], 256
    $region49: #{tpu_custom_call.1} parent=1 // pred_fallthru
      _
    %1524 = vsyncpa [#allocation7], 1
    %1525 = vsyncpa [#allocation10], 1
    %1526 = vsyncpa [#allocation13], 1
    %1527 = vsyncpa [#allocation8], 1

</llo_original>
